<compile_context>
chip_gen: v7x
topology: tpu7x:2x2x1
jax: 0.10.0
libtpu: 0.0.40
codegen_flags: <defaults>
</compile_context>

<pallas_src>
import functools

import jax
import jax.numpy as jnp
from jax import lax
from jax.experimental import pallas as pl
from jax.experimental.pallas import tpu as pltpu


def _gatedgcn_kernel(
    e_ref, ssrc_ref, sdst_ref, snorm_e_ref,        # streamed per edge tile
    msg_rhs_ref, bh_ref, ah_ref, snorm_n_ref,      # node-resident constants
    lnh_g_ref, lnh_b_ref, lne_g_ref, lne_b_ref,    # LayerNorm affine params
    h_out_ref, e_out_ref,                          # outputs
    acc_ref,                                       # [num | den] f32 accumulator scratch
    *, dout,
):
    f32 = jnp.float32
    et = pl.program_id(0)
    n_et = pl.num_programs(0)

    def _ln(x, g, b):
        # nn.LayerNorm, eps=1e-5
        mu = jnp.mean(x, axis=-1, keepdims=True)
        var = jnp.mean((x - mu) * (x - mu), axis=-1, keepdims=True)
        return (x - mu) * lax.rsqrt(var + 1e-5) * g + b

    @pl.when(et == 0)
    def _():
        acc_ref[...] = jnp.zeros_like(acc_ref)

    ssrc = ssrc_ref[...]                       # (TE, N) bf16 one-hot (edge source)
    sdst = sdst_ref[...]                       # (TE, N) bf16 one-hot (edge destination)

    # Fused K = Din + 2N matmul: Ce + Dh[src] + Eh[dst], bf16 operands, f32 accumulation.
    lhs = jnp.concatenate([e_ref[...], ssrc, sdst], axis=-1)             # (TE, Din+2N) bf16
    e_act = jnp.maximum(
        jnp.dot(lhs, msg_rhs_ref[...], preferred_element_type=f32), 0.0)  # relu(e_ij)
    # sigmoid via EUP exp + EUP approx reciprocal (keeps VALU slots free)
    sigma = pl.reciprocal(1.0 + jnp.exp(-e_act), approx=True)

    # Gather Bh from the source node of each edge (bf16 x bf16 MXU, f32 acc).
    bh_src = jnp.dot(ssrc, bh_ref[...], preferred_element_type=f32)       # (TE, Dout)

    # Fused scatter-add: contract the edge axis once for numerator AND denominator.
    # If MLIR shows an XLU transpose here, pass a pre-transposed (N, E) sdst_T input instead
    # (costs streaming sdst twice from HBM; prefer this single-copy form on v5e).
    payload = jnp.concatenate([sigma * bh_src, sigma], axis=-1).astype(jnp.bfloat16)
    dn = (((0,), (0,)), ((), ()))
    acc_ref[...] += lax.dot_general(sdst, payload, dn, preferred_element_type=f32)

    # Edge output for this tile: graph_norm -> layer_norm -> relu (dropout: eval identity).
    e_new = e_act * snorm_e_ref[...]
    e_new = _ln(e_new, lne_g_ref[...], lne_b_ref[...])
    e_out_ref[...] = jnp.maximum(e_new, 0.0).astype(e_out_ref.dtype)

    # Finalize node features on the last edge tile.
    @pl.when(et == n_et - 1)
    def _():
        num = acc_ref[:, 0:dout]
        den = acc_ref[:, dout:2 * dout]
        h_new = ah_ref[...] + num * pl.reciprocal(den + 1e-6, approx=True)  # 'sum' agg
        h_new = h_new * snorm_n_ref[...]                                    # graph_norm
        h_new = _ln(h_new, lnh_g_ref[...], lnh_b_ref[...])                  # layer_norm
        h_out_ref[...] = jnp.maximum(h_new, 0.0).astype(h_out_ref.dtype)    # relu


def _resident_spec(block_shape):
    """Constant-index-map block; fetch once (single-buffered) when supported."""
    idx = lambda t: (0, 0)
    buffered = getattr(pl, "Buffered", None)
    if buffered is not None:
        try:
            return pl.BlockSpec(block_shape, idx, pipeline_mode=buffered(1))
        except TypeError:
            pass
    return pl.BlockSpec(block_shape, idx)


def _vmem_limit_bytes(edge_tile, n, din, dout):
    """Derive vmem_limit from the actual block footprint and device VMEM capacity."""
    bf16, f32 = 2, 4
    streamed = edge_tile * (din + 2 * n) * bf16      # e + ssrc + sdst tiles
    streamed += edge_tile * f32                      # snorm_e tile
    streamed += edge_tile * dout * bf16              # e_out tile
    streamed *= 2                                    # double-buffered pipeline
    resident = (din + 2 * n) * dout * bf16           # [Wc; Dh; Eh]
    resident += n * dout * (bf16 + f32)              # Bh (bf16) + Ah (f32)
    resident += n * f32 + 4 * dout * f32             # snorm_n + LN gamma/beta
    resident += 2 * n * dout * f32                   # h_out block (worst case 2 buffers)
    scratch = n * 2 * dout * f32                     # [num | den] accumulator
    need = streamed + resident + scratch
    cap = 64 * 1024 * 1024                           # conservative default (v7x)
    try:
        cap = pltpu.get_tpu_info().vmem_capacity_bytes
    except Exception:
        pass
    return int(min(max(2 * need, 32 * 1024 * 1024), 0.85 * cap))


@functools.partial(jax.jit, static_argnames=("edge_tile",))
def gated_gcn_forward(h, e, ssrc, sdst, params, snorm_n, snorm_e, *, edge_tile=256):
    N, Din = h.shape
    E, _ = e.shape
    Dout = params["C"].shape[1]
    assert E % edge_tile == 0, "demo requires E to be a multiple of edge_tile"
    num_tiles = E // edge_tile

    # ---- node projections hoisted out of the kernel: one full-MXU XLA matmul ----
    w_node = jnp.concatenate([params["D"], params["E"], params["B"], params["A"]], axis=1)
    hw = jnp.dot(h, w_node)                              # (N, 4*Dout) f32
    Dh = hw[:, 0 * Dout:1 * Dout]
    Eh = hw[:, 1 * Dout:2 * Dout]
    Bh = hw[:, 2 * Dout:3 * Dout]
    Ah = hw[:, 3 * Dout:4 * Dout]

    # Fused RHS for the K = Din + 2N message matmul (bf16 feeds the MXU fast path).
    msg_rhs = jnp.concatenate([params["C"], Dh, Eh], axis=0).astype(jnp.bfloat16)
    bh = Bh.astype(jnp.bfloat16)
    ah = Ah                                              # keep f32 (added at finalize)
    e_bf = e.astype(jnp.bfloat16)

    kernel = functools.partial(_gatedgcn_kernel, dout=Dout)

    grid_spec = pltpu.PrefetchScalarGridSpec(
        num_scalar_prefetch=0,
        grid=(num_tiles,),
        in_specs=[
            # Streamed per-edge-tile blocks.  On v5e, if xprof shows exposed DMA for these
            # streams, raise to pipeline_mode=pl.Buffered(3) (VMEM budget permitting).
            pl.BlockSpec((edge_tile, Din), lambda t: (t, 0)),     # e tile (bf16)
            pl.BlockSpec((edge_tile, N), lambda t: (t, 0)),       # src one-hot tile (bf16)
            pl.BlockSpec((edge_tile, N), lambda t: (t, 0)),       # dst one-hot tile (bf16)
            pl.BlockSpec((edge_tile, 1), lambda t: (t, 0)),       # snorm_e tile
            # Node-resident constants (fetched once).
            _resident_spec((Din + 2 * N, Dout)),                  # [Wc; Dh; Eh] (bf16)
            _resident_spec((N, Dout)),                            # Bh (bf16)
            _resident_spec((N, Dout)),                            # Ah (f32)
            _resident_spec((N, 1)),                               # snorm_n
            _resident_spec((1, Dout)),                            # LN(h) gamma
            _resident_spec((1, Dout)),                            # LN(h) beta
            _resident_spec((1, Dout)),                            # LN(e) gamma
            _resident_spec((1, Dout)),                            # LN(e) beta
        ],
        out_specs=[
            pl.BlockSpec((N, Dout), lambda t: (0, 0)),            # h_out (resident, finalize)
            pl.BlockSpec((edge_tile, Dout), lambda t: (t, 0)),    # e_out per edge tile (bf16)
        ],
        scratch_shapes=[
            pltpu.VMEM((N, 2 * Dout), jnp.float32),               # [num | den] accumulator
        ],
    )

    return pl.pallas_call(
        kernel,
        out_shape=(
            jax.ShapeDtypeStruct((N, Dout), jnp.float32),
            jax.ShapeDtypeStruct((E, Dout), jnp.bfloat16),
        ),
        grid_spec=grid_spec,
        compiler_params=pltpu.CompilerParams(
            dimension_semantics=("arbitrary",),   # edge axis is a reduction (scatter-sum)
            vmem_limit_bytes=_vmem_limit_bytes(edge_tile, N, Din, Dout),
        ),
    )(
        e_bf, ssrc, sdst, snorm_e,
        msg_rhs, bh, ah, snorm_n,
        params["ln_h_g"], params["ln_h_b"], params["ln_e_g"], params["ln_e_b"],
    )


def _reference(h, e, src, dst, params, snorm_n, snorm_e):
    """Pure-JAX f32 reference mirroring the PyTorch/DGL semantics (sum agg, eval mode)."""
    Ah = h @ params["A"]; Bh = h @ params["B"]; Dh = h @ params["D"]; Eh = h @ params["E"]
    Ce = e @ params["C"]
    e_ij = jax.nn.relu(Ce + Dh[src] + Eh[dst])
    sig = jax.nn.sigmoid(e_ij)
    num = jax.ops.segment_sum(sig * Bh[src], dst, num_segments=h.shape[0])
    den = jax.ops.segment_sum(sig, dst, num_segments=h.shape[0])
    h_new = Ah + num / (den + 1e-6)
    h_new = h_new * snorm_n
    e_new = e_ij * snorm_e

    def ln(x, g, b):
        mu = jnp.mean(x, -1, keepdims=True)
        var = jnp.mean((x - mu) ** 2, -1, keepdims=True)
        return (x - mu) * jax.lax.rsqrt(var + 1e-5) * g + b

    h_new = ln(h_new, params["ln_h_g"], params["ln_h_b"])
    e_new = ln(e_new, params["ln_e_g"], params["ln_e_b"])
    return jax.nn.relu(h_new), jax.nn.relu(e_new)


if __name__ == "__main__":
    key = jax.random.PRNGKey(0)
    N, E, D_in, D_out, TE = 64, 512, 64, 128, 256   # 2 edge tiles; Dout lane-dense (128)

    keys = jax.random.split(key, 12)
    h = jax.random.normal(keys[0], (N, D_in), jnp.float32)
    e = jax.random.normal(keys[1], (E, D_in), jnp.float32)

    # Edge list: first N edges guarantee every node has an incoming edge.
    src = jax.random.randint(keys[2], (E,), 0, N).astype(jnp.int32)
    dst_tail = jax.random.randint(keys[3], (E - N,), 0, N).astype(jnp.int32)
    dst = jnp.concatenate([jnp.arange(N, dtype=jnp.int32), dst_tail])

    # One-hot gather/scatter operators in bf16 (0/1 exact; half the HBM bytes, MXU bf16 path).
    ssrc = jax.nn.one_hot(src, N, dtype=jnp.bfloat16)   # (E, N)
    sdst = jax.nn.one_hot(dst, N, dtype=jnp.bfloat16)   # (E, N)

    # Deterministic "Bayesian" linear weights (stored as (Din, Dout) = W^T).
    scale = 0.1
    params = {
        "A": scale * jax.random.normal(keys[4], (D_in, D_out), jnp.float32),
        "B": scale * jax.random.normal(keys[5], (D_in, D_out), jnp.float32),
        "C": scale * jax.random.normal(keys[6], (D_in, D_out), jnp.float32),
        "D": scale * jax.random.normal(keys[7], (D_in, D_out), jnp.float32),
        "E": scale * jax.random.normal(keys[8], (D_in, D_out), jnp.float32),
        # LayerNorm affine params (nn.LayerNorm default init: weight=1, bias=0)
        "ln_h_g": jnp.ones((1, D_out), jnp.float32),
        "ln_h_b": jnp.zeros((1, D_out), jnp.float32),
        "ln_e_g": jnp.ones((1, D_out), jnp.float32),
        "ln_e_b": jnp.zeros((1, D_out), jnp.float32),
    }

    snorm_n = jnp.full((N, 1), 1.0 / jnp.sqrt(float(N)), jnp.float32)
    snorm_e = jnp.full((E, 1), 1.0 / jnp.sqrt(float(E)), jnp.float32)

    h_out, e_out = gated_gcn_forward(h, e, ssrc, sdst, params, snorm_n, snorm_e, edge_tile=TE)
    jax.block_until_ready((h_out, e_out))

    h_ref, e_ref = _reference(h, e, src, dst, params, snorm_n, snorm_e)
    # Tolerance accounts for the bf16 MXU path (projections, messages, payload, e_out) and
    # the EUP approx reciprocals (sigmoid + sum-agg divide); one-hot selection stays exact.
    assert jnp.allclose(h_out, h_ref, atol=3e-2, rtol=3e-2), "node feature mismatch"
    assert jnp.allclose(e_out.astype(jnp.float32), e_ref, atol=3e-2, rtol=3e-2), \
        "edge feature mismatch"

    print("KERNEL_OK")
</pallas_src>

<mosaic_0001>
module attributes {stable_mosaic.version = 11 : i64} {
  func.func @_gatedgcn_kernel(%arg0: i32, %arg1: memref<256x64xbf16, #tpu.memory_space<vmem>>, %arg2: memref<256x64xbf16, #tpu.memory_space<vmem>>, %arg3: memref<256x64xbf16, #tpu.memory_space<vmem>>, %arg4: memref<256x1xf32, #tpu.memory_space<vmem>>, %arg5: memref<192x128xbf16, #tpu.memory_space<vmem>>, %arg6: memref<64x128xbf16, #tpu.memory_space<vmem>>, %arg7: memref<64x128xf32, #tpu.memory_space<vmem>>, %arg8: memref<64x1xf32, #tpu.memory_space<vmem>>, %arg9: memref<1x128xf32, #tpu.memory_space<vmem>>, %arg10: memref<1x128xf32, #tpu.memory_space<vmem>>, %arg11: memref<1x128xf32, #tpu.memory_space<vmem>>, %arg12: memref<1x128xf32, #tpu.memory_space<vmem>>, %arg13: memref<64x128xf32, #tpu.memory_space<vmem>>, %arg14: memref<256x128xbf16, #tpu.memory_space<vmem>>, %arg15: memref<64x256xf32, #tpu.memory_space<vmem>>) attributes {dimension_semantics = [#tpu.dimension_semantics<arbitrary>], iteration_bounds = array<i64: 2>, scalar_prefetch = 0 : i64, scratch_operands = 1 : i64, tpu.core_type = #tpu.core_type<tc>, window_params = [{transform_indices = @transform_0, window_bounds = array<i64: 256, 64>}, {transform_indices = @transform_1, window_bounds = array<i64: 256, 64>}, {transform_indices = @transform_2, window_bounds = array<i64: 256, 64>}, {transform_indices = @transform_3, window_bounds = array<i64: 256, 1>}, {pipeline_mode = #tpu.pipeline_mode<synchronous>, transform_indices = @transform_4, window_bounds = array<i64: 192, 128>}, {pipeline_mode = #tpu.pipeline_mode<synchronous>, transform_indices = @transform_5, window_bounds = array<i64: 64, 128>}, {pipeline_mode = #tpu.pipeline_mode<synchronous>, transform_indices = @transform_6, window_bounds = array<i64: 64, 128>}, {pipeline_mode = #tpu.pipeline_mode<synchronous>, transform_indices = @transform_7, window_bounds = array<i64: 64, 1>}, {pipeline_mode = #tpu.pipeline_mode<synchronous>, transform_indices = @transform_8, window_bounds = array<i64: 1, 128>}, {pipeline_mode = #tpu.pipeline_mode<synchronous>, transform_indices = @transform_9, window_bounds = array<i64: 1, 128>}, {pipeline_mode = #tpu.pipeline_mode<synchronous>, transform_indices = @transform_10, window_bounds = array<i64: 1, 128>}, {pipeline_mode = #tpu.pipeline_mode<synchronous>, transform_indices = @transform_11, window_bounds = array<i64: 1, 128>}, {pipeline_mode = #tpu.pipeline_mode<synchronous>, transform_indices = @transform_12, window_bounds = array<i64: 64, 128>}, {transform_indices = @transform_13, window_bounds = array<i64: 256, 128>}]} {
    %c0_i32 = arith.constant 0 : i32
    %0 = arith.cmpi eq, %arg0, %c0_i32 : i32
    %1 = arith.extui %0 : i1 to i32
    %c0_i32_0 = arith.constant 0 : i32
    %2 = arith.cmpi ne, %1, %c0_i32_0 : i32
    scf.if %2 {
      %cst_34 = arith.constant 0.000000e+00 : f32
      %62 = vector.broadcast %cst_34 : f32 to vector<64x256xf32>
      %c0_35 = arith.constant 0 : index
      %c0_36 = arith.constant 0 : index
      %63 = vector.load %arg15[%c0_35, %c0_36] : memref<64x256xf32, #tpu.memory_space<vmem>>, vector<64x256xf32>
      tpu.vector_store %arg15[%c0_35, %c0_36], %62 {strides = array<i32>} : memref<64x256xf32, #tpu.memory_space<vmem>>, vector<64x256xf32>,
    } else {
    }
    %c0 = arith.constant 0 : index
    %c0_1 = arith.constant 0 : index
    %3 = vector.load %arg2[%c0, %c0_1] : memref<256x64xbf16, #tpu.memory_space<vmem>>, vector<256x64xbf16>
    %c0_2 = arith.constant 0 : index
    %c0_3 = arith.constant 0 : index
    %4 = vector.load %arg3[%c0_2, %c0_3] : memref<256x64xbf16, #tpu.memory_space<vmem>>, vector<256x64xbf16>
    %c0_4 = arith.constant 0 : index
    %c0_5 = arith.constant 0 : index
    %5 = vector.load %arg1[%c0_4, %c0_5] : memref<256x64xbf16, #tpu.memory_space<vmem>>, vector<256x64xbf16>
    %6 = tpu.concatenate %5, %3, %4 in 1 : vector<256x64xbf16>, vector<256x64xbf16>, vector<256x64xbf16> -> vector<256x192xbf16>
    %c0_6 = arith.constant 0 : index
    %c0_7 = arith.constant 0 : index
    %7 = vector.load %arg5[%c0_6, %c0_7] : memref<192x128xbf16, #tpu.memory_space<vmem>>, vector<192x128xbf16>
    %cst = arith.constant dense<0.000000e+00> : vector<256x128xf32>
    %8 = tpu.matmul %6, %7, %cst {dimension_numbers = #tpu.dot_dimension_numbers<[1], [0], [0], [1], [0, 0, 1, 1], [], []>} : vector<256x192xbf16>, vector<192x128xbf16>, vector<256x128xf32> -> vector<256x128xf32>
    %cst_8 = arith.constant 0.000000e+00 : f32
    %9 = vector.broadcast %cst_8 : f32 to vector<256x128xf32>
    %10 = arith.maximumf %8, %9 : vector<256x128xf32>
    %cst_9 = arith.constant 0.000000e+00 : f32
    %11 = vector.broadcast %cst_9 : f32 to vector<256x128xf32>
    %12 = arith.subf %11, %10 : vector<256x128xf32>
    %13 = math.exp %12 : vector<256x128xf32>
    %cst_10 = arith.constant 1.000000e+00 : f32
    %14 = vector.broadcast %cst_10 : f32 to vector<256x128xf32>
    %15 = arith.addf %14, %13 : vector<256x128xf32>
    %16 = tpu.reciprocal %15 {approx = true} : vector<256x128xf32> -> vector<256x128xf32>
    %c0_11 = arith.constant 0 : index
    %c0_12 = arith.constant 0 : index
    %17 = vector.load %arg6[%c0_11, %c0_12] : memref<64x128xbf16, #tpu.memory_space<vmem>>, vector<64x128xbf16>
    %cst_13 = arith.constant dense<0.000000e+00> : vector<256x128xf32>
    %18 = tpu.matmul %3, %17, %cst_13 {dimension_numbers = #tpu.dot_dimension_numbers<[1], [0], [0], [1], [0, 0, 1, 1], [], []>} : vector<256x64xbf16>, vector<64x128xbf16>, vector<256x128xf32> -> vector<256x128xf32>
    %19 = arith.mulf %16, %18 : vector<256x128xf32>
    %20 = tpu.concatenate %19, %16 in 1 : vector<256x128xf32>, vector<256x128xf32> -> vector<256x256xf32>
    %21 = arith.truncf %20 : vector<256x256xf32> to vector<256x256xbf16>
    %c0_14 = arith.constant 0 : index
    %c0_15 = arith.constant 0 : index
    %22 = vector.load %arg15[%c0_14, %c0_15] : memref<64x256xf32, #tpu.memory_space<vmem>>, vector<64x256xf32>
    %cst_16 = arith.constant dense<0.000000e+00> : vector<64x256xf32>
    %23 = tpu.matmul %4, %21, %cst_16 {dimension_numbers = #tpu.dot_dimension_numbers<[0], [0], [1], [1], [0, 1, 1, 1], [], []>} : vector<256x64xbf16>, vector<256x256xbf16>, vector<64x256xf32> -> vector<64x256xf32>
    %24 = arith.addf %22, %23 : vector<64x256xf32>
    %c0_17 = arith.constant 0 : index
    %c0_18 = arith.constant 0 : index
    %25 = vector.load %arg15[%c0_17, %c0_18] : memref<64x256xf32, #tpu.memory_space<vmem>>, vector<64x256xf32>
    tpu.vector_store %arg15[%c0_17, %c0_18], %24 {strides = array<i32>} : memref<64x256xf32, #tpu.memory_space<vmem>>, vector<64x256xf32>,
    %c0_19 = arith.constant 0 : index
    %c0_20 = arith.constant 0 : index
    %26 = vector.load %arg4[%c0_19, %c0_20] : memref<256x1xf32, #tpu.memory_space<vmem>>, vector<256x1xf32>
    %27 = vector.broadcast %26 : vector<256x1xf32> to vector<256x128xf32>
    %28 = arith.mulf %10, %27 : vector<256x128xf32>
    %c0_21 = arith.constant 0 : index
    %c0_22 = arith.constant 0 : index
    %29 = vector.load %arg11[%c0_21, %c0_22] : memref<1x128xf32, #tpu.memory_space<vmem>>, vector<1x128xf32>
    %c0_23 = arith.constant 0 : index
    %c0_24 = arith.constant 0 : index
    %30 = vector.load %arg12[%c0_23, %c0_24] : memref<1x128xf32, #tpu.memory_space<vmem>>, vector<1x128xf32>
    %cst_25 = arith.constant dense<0.000000e+00> : vector<256xf32>
    %31 = vector.multi_reduction <add>, %28, %cst_25 [1] : vector<256x128xf32> to vector<256xf32>
    %32 = vector.shape_cast %31 : vector<256xf32> to vector<256x1xf32>
    %cst_26 = arith.constant 1.280000e+02 : f32
    %33 = vector.broadcast %cst_26 : f32 to vector<256x1xf32>
    %34 = arith.divf %32, %33 : vector<256x1xf32>
    %35 = vector.broadcast %34 : vector<256x1xf32> to vector<256x128xf32>
    %36 = arith.subf %28, %35 : vector<256x128xf32>
    %37 = vector.broadcast %34 : vector<256x1xf32> to vector<256x128xf32>
    %38 = arith.subf %28, %37 : vector<256x128xf32>
    %39 = arith.mulf %36, %38 : vector<256x128xf32>
    %cst_27 = arith.constant dense<0.000000e+00> : vector<256xf32>
    %40 = vector.multi_reduction <add>, %39, %cst_27 [1] : vector<256x128xf32> to vector<256xf32>
    %41 = vector.shape_cast %40 : vector<256xf32> to vector<256x1xf32>
    %cst_28 = arith.constant 1.280000e+02 : f32
    %42 = vector.broadcast %cst_28 : f32 to vector<256x1xf32>
    %43 = arith.divf %41, %42 : vector<256x1xf32>
    %44 = vector.broadcast %34 : vector<256x1xf32> to vector<256x128xf32>
    %45 = arith.subf %28, %44 : vector<256x128xf32>
    %cst_29 = arith.constant 9.99999974E-6 : f32
    %46 = vector.broadcast %cst_29 : f32 to vector<256x1xf32>
    %47 = arith.addf %43, %46 : vector<256x1xf32>
    %48 = math.rsqrt %47 : vector<256x1xf32>
    %49 = vector.broadcast %48 : vector<256x1xf32> to vector<256x128xf32>
    %50 = arith.mulf %45, %49 : vector<256x128xf32>
    %51 = vector.broadcast %29 : vector<1x128xf32> to vector<256x128xf32>
    %52 = arith.mulf %50, %51 : vector<256x128xf32>
    %53 = vector.broadcast %30 : vector<1x128xf32> to vector<256x128xf32>
    %54 = arith.addf %52, %53 : vector<256x128xf32>
    %cst_30 = arith.constant 0.000000e+00 : f32
    %55 = vector.broadcast %cst_30 : f32 to vector<256x128xf32>
    %56 = arith.maximumf %54, %55 : vector<256x128xf32>
    %57 = arith.truncf %56 : vector<256x128xf32> to vector<256x128xbf16>
    %c0_31 = arith.constant 0 : index
    %c0_32 = arith.constant 0 : index
    %58 = vector.load %arg14[%c0_31, %c0_32] : memref<256x128xbf16, #tpu.memory_space<vmem>>, vector<256x128xbf16>
    tpu.vector_store %arg14[%c0_31, %c0_32], %57 {strides = array<i32>} : memref<256x128xbf16, #tpu.memory_space<vmem>>, vector<256x128xbf16>,
    %c1_i32 = arith.constant 1 : i32
    %59 = arith.cmpi eq, %arg0, %c1_i32 : i32
    %60 = arith.extui %59 : i1 to i32
    %c0_i32_33 = arith.constant 0 : i32
    %61 = arith.cmpi ne, %60, %c0_i32_33 : i32
    scf.if %61 {
      %c0_34 = arith.constant 0 : index
      %c0_35 = arith.constant 0 : index
      %62 = vector.load %arg15[%c0_34, %c0_35] : memref<64x256xf32, #tpu.memory_space<vmem>>, vector<64x128xf32>
      %c0_36 = arith.constant 0 : index
      %c128 = arith.constant 128 : index
      %63 = vector.load %arg15[%c0_36, %c128] : memref<64x256xf32, #tpu.memory_space<vmem>>, vector<64x128xf32>
      %c0_37 = arith.constant 0 : index
      %c0_38 = arith.constant 0 : index
      %64 = vector.load %arg7[%c0_37, %c0_38] : memref<64x128xf32, #tpu.memory_space<vmem>>, vector<64x128xf32>
      %cst_39 = arith.constant 9.99999997E-7 : f32
      %65 = vector.broadcast %cst_39 : f32 to vector<64x128xf32>
      %66 = arith.addf %63, %65 : vector<64x128xf32>
      %67 = tpu.reciprocal %66 {approx = true} : vector<64x128xf32> -> vector<64x128xf32>
      %68 = arith.mulf %62, %67 : vector<64x128xf32>
      %69 = arith.addf %64, %68 : vector<64x128xf32>
      %c0_40 = arith.constant 0 : index
      %c0_41 = arith.constant 0 : index
      %70 = vector.load %arg8[%c0_40, %c0_41] : memref<64x1xf32, #tpu.memory_space<vmem>>, vector<64x1xf32>
      %71 = vector.broadcast %70 : vector<64x1xf32> to vector<64x128xf32>
      %72 = arith.mulf %69, %71 : vector<64x128xf32>
      %c0_42 = arith.constant 0 : index
      %c0_43 = arith.constant 0 : index
      %73 = vector.load %arg9[%c0_42, %c0_43] : memref<1x128xf32, #tpu.memory_space<vmem>>, vector<1x128xf32>
      %c0_44 = arith.constant 0 : index
      %c0_45 = arith.constant 0 : index
      %74 = vector.load %arg10[%c0_44, %c0_45] : memref<1x128xf32, #tpu.memory_space<vmem>>, vector<1x128xf32>
      %cst_46 = arith.constant dense<0.000000e+00> : vector<64xf32>
      %75 = vector.multi_reduction <add>, %72, %cst_46 [1] : vector<64x128xf32> to vector<64xf32>
      %76 = vector.shape_cast %75 : vector<64xf32> to vector<64x1xf32>
      %cst_47 = arith.constant 1.280000e+02 : f32
      %77 = vector.broadcast %cst_47 : f32 to vector<64x1xf32>
      %78 = arith.divf %76, %77 : vector<64x1xf32>
      %79 = vector.broadcast %78 : vector<64x1xf32> to vector<64x128xf32>
      %80 = arith.subf %72, %79 : vector<64x128xf32>
      %81 = vector.broadcast %78 : vector<64x1xf32> to vector<64x128xf32>
      %82 = arith.subf %72, %81 : vector<64x128xf32>
      %83 = arith.mulf %80, %82 : vector<64x128xf32>
      %cst_48 = arith.constant dense<0.000000e+00> : vector<64xf32>
      %84 = vector.multi_reduction <add>, %83, %cst_48 [1] : vector<64x128xf32> to vector<64xf32>
      %85 = vector.shape_cast %84 : vector<64xf32> to vector<64x1xf32>
      %cst_49 = arith.constant 1.280000e+02 : f32
      %86 = vector.broadcast %cst_49 : f32 to vector<64x1xf32>
      %87 = arith.divf %85, %86 : vector<64x1xf32>
      %88 = vector.broadcast %78 : vector<64x1xf32> to vector<64x128xf32>
      %89 = arith.subf %72, %88 : vector<64x128xf32>
      %cst_50 = arith.constant 9.99999974E-6 : f32
      %90 = vector.broadcast %cst_50 : f32 to vector<64x1xf32>
      %91 = arith.addf %87, %90 : vector<64x1xf32>
      %92 = math.rsqrt %91 : vector<64x1xf32>
      %93 = vector.broadcast %92 : vector<64x1xf32> to vector<64x128xf32>
      %94 = arith.mulf %89, %93 : vector<64x128xf32>
      %95 = vector.broadcast %73 : vector<1x128xf32> to vector<64x128xf32>
      %96 = arith.mulf %94, %95 : vector<64x128xf32>
      %97 = vector.broadcast %74 : vector<1x128xf32> to vector<64x128xf32>
      %98 = arith.addf %96, %97 : vector<64x128xf32>
      %cst_51 = arith.constant 0.000000e+00 : f32
      %99 = vector.broadcast %cst_51 : f32 to vector<64x128xf32>
      %100 = arith.maximumf %98, %99 : vector<64x128xf32>
      %c0_52 = arith.constant 0 : index
      %c0_53 = arith.constant 0 : index
      %101 = vector.load %arg13[%c0_52, %c0_53] : memref<64x128xf32, #tpu.memory_space<vmem>>, vector<64x128xf32>
      tpu.vector_store %arg13[%c0_52, %c0_53], %100 {strides = array<i32>} : memref<64x128xf32, #tpu.memory_space<vmem>>, vector<64x128xf32>,
    } else {
    }
    return
  }
  func.func @transform_0(%arg0: i32) -> (i32, i32) {
    %c0_i32 = arith.constant 0 : i32
    %c0_i32_0 = arith.constant 0 : i32
    return %arg0, %c0_i32 : i32, i32
  }
  func.func @transform_1(%arg0: i32) -> (i32, i32) {
    %c0_i32 = arith.constant 0 : i32
    %c0_i32_0 = arith.constant 0 : i32
    return %arg0, %c0_i32 : i32, i32
  }
  func.func @transform_2(%arg0: i32) -> (i32, i32) {
    %c0_i32 = arith.constant 0 : i32
    %c0_i32_0 = arith.constant 0 : i32
    return %arg0, %c0_i32 : i32, i32
  }
  func.func @transform_3(%arg0: i32) -> (i32, i32) {
    %c0_i32 = arith.constant 0 : i32
    %c0_i32_0 = arith.constant 0 : i32
    return %arg0, %c0_i32 : i32, i32
  }
  func.func @transform_4(%arg0: i32) -> (i32, i32) {
    %c0_i32 = arith.constant 0 : i32
    %c0_i32_0 = arith.constant 0 : i32
    %c0_i32_1 = arith.constant 0 : i32
    return %c0_i32, %c0_i32_0 : i32, i32
  }
  func.func @transform_5(%arg0: i32) -> (i32, i32) {
    %c0_i32 = arith.constant 0 : i32
    %c0_i32_0 = arith.constant 0 : i32
    %c0_i32_1 = arith.constant 0 : i32
    return %c0_i32, %c0_i32_0 : i32, i32
  }
  func.func @transform_6(%arg0: i32) -> (i32, i32) {
    %c0_i32 = arith.constant 0 : i32
    %c0_i32_0 = arith.constant 0 : i32
    %c0_i32_1 = arith.constant 0 : i32
    return %c0_i32, %c0_i32_0 : i32, i32
  }
  func.func @transform_7(%arg0: i32) -> (i32, i32) {
    %c0_i32 = arith.constant 0 : i32
    %c0_i32_0 = arith.constant 0 : i32
    %c0_i32_1 = arith.constant 0 : i32
    return %c0_i32, %c0_i32_0 : i32, i32
  }
  func.func @transform_8(%arg0: i32) -> (i32, i32) {
    %c0_i32 = arith.constant 0 : i32
    %c0_i32_0 = arith.constant 0 : i32
    %c0_i32_1 = arith.constant 0 : i32
    return %c0_i32, %c0_i32_0 : i32, i32
  }
  func.func @transform_9(%arg0: i32) -> (i32, i32) {
    %c0_i32 = arith.constant 0 : i32
    %c0_i32_0 = arith.constant 0 : i32
    %c0_i32_1 = arith.constant 0 : i32
    return %c0_i32, %c0_i32_0 : i32, i32
  }
  func.func @transform_10(%arg0: i32) -> (i32, i32) {
    %c0_i32 = arith.constant 0 : i32
    %c0_i32_0 = arith.constant 0 : i32
    %c0_i32_1 = arith.constant 0 : i32
    return %c0_i32, %c0_i32_0 : i32, i32
  }
  func.func @transform_11(%arg0: i32) -> (i32, i32) {
    %c0_i32 = arith.constant 0 : i32
    %c0_i32_0 = arith.constant 0 : i32
    %c0_i32_1 = arith.constant 0 : i32
    return %c0_i32, %c0_i32_0 : i32, i32
  }
  func.func @transform_12(%arg0: i32) -> (i32, i32) {
    %c0_i32 = arith.constant 0 : i32
    %c0_i32_0 = arith.constant 0 : i32
    %c0_i32_1 = arith.constant 0 : i32
    return %c0_i32, %c0_i32_0 : i32, i32
  }
  func.func @transform_13(%arg0: i32) -> (i32, i32) {
    %c0_i32 = arith.constant 0 : i32
    %c0_i32_0 = arith.constant 0 : i32
    return %arg0, %c0_i32 : i32, i32
  }
}

</mosaic_0001>

<llo_original>
// kernel: gated_gcn_forward.1
$region0: #{gated_gcn_forward.1}
  #allocation0 [shape = 'u32[]', space=smem, size = 0x4, offset = 0x4, fixed_abs, tag = 'smem constant byte address 0x4 - core index']
  #allocation1 [shape = 'u32[144,128]{1,0:T(1,128)}', space=vmem, size = 0x12000, scoped, tag = 'internal scratch']
  #allocation2 [shape = 'f32[64,256]{1,0:T(8,128)}', space=vmem, size = 0x10000, scoped, tag = 'scratch operand']
  %s0 = inlined_call_operand.vmem [shape: bf16[512,64], index: 0, kind: input, shape index: {}]
  %s1 = inlined_call_operand.vmem [shape: bf16[512,64], index: 1, kind: input, shape index: {}]
  %s2 = inlined_call_operand.vmem [shape: bf16[512,64], index: 2, kind: input, shape index: {}]
  %s3 = inlined_call_operand.vmem [shape: f32[512,1], index: 3, kind: input, shape index: {}]
  %s4 = inlined_call_operand.vmem [shape: bf16[192,128], index: 4, kind: input, shape index: {}]
  %s5 = inlined_call_operand.vmem [shape: bf16[64,128], index: 5, kind: input, shape index: {}]
  %s6 = inlined_call_operand.vmem [shape: f32[64,128], index: 6, kind: input, shape index: {}]
  %s7 = inlined_call_operand.vmem [shape: f32[64,1], index: 7, kind: input, shape index: {}]
  %s8 = inlined_call_operand.vmem [shape: f32[1,128], index: 8, kind: input, shape index: {}]
  %s9 = inlined_call_operand.vmem [shape: f32[1,128], index: 9, kind: input, shape index: {}]
  %s10 = inlined_call_operand.vmem [shape: f32[1,128], index: 10, kind: input, shape index: {}]
  %s11 = inlined_call_operand.vmem [shape: f32[1,128], index: 11, kind: input, shape index: {}]
  %s12 = inlined_call_operand.hbm [shape: f32[64,128], index: 12, kind: output, shape index: {0}]
  %s13 = inlined_call_operand.hbm [shape: bf16[512,128], index: 13, kind: output, shape index: {1}]
  %14 = xla_tuple %s12, %s13
  %s15 = sld [smem:[#allocation0]]
  $region97: #{gated_gcn_forward.1} parent=0
    _
  %s17 = ssub.s32 1, %s15
  %s18 = scalar_select 0, %s17, %s15
  $region1: #{gated_gcn_forward.1} parent=0
    #allocation3 [shape = 'u8[32768]{0}', space=vmem, size = 0x8000, scoped, tag = 'output window, operand 0, single buffered']
    #allocation4 [shape = 's32[2]{0}', space=sflag, size = 0x8, scoped, tag = 'scoped memory for gated_gcn_forward.1']
    #allocation5 [shape = 'u8[131072]{0}', space=vmem, size = 0x20000, scoped, tag = 'output window, operand 1']
    #allocation6 [shape = 's32[2]{0}', space=sflag, size = 0x8, scoped, tag = 'scoped memory for gated_gcn_forward.1']
    %19 = vsyncpa [#allocation4], 0
    %20 = vsyncpa [#allocation6], 0
    %s21 = scalar_lea.sflag [#allocation6], 1
    %22 = vsyncpa %s21, 0
    loop: start=0, step=1, limit=4
    $region2: #{gated_gcn_forward.1} parent=1 // loop_pre_header
      _
    $region3: #{gated_gcn_forward.1} parent=1 // loop_header
      %s24 = sphi 0, %s28
      %p25 = scmp.ge.s32.totalorder %s24, 4
      %s34 = sphi 0, %s36
      %s37 = sphi 0, %s34
      %s38 = sphi 0, %s37
      %s54 = sphi 0, %s38
      %s60 = sphi 0, %s62
      %s63 = sphi 0, %s60
      %s64 = sphi 0, %s63
      %s80 = sphi 0, %s64
      %s86 = sphi 0, %s88
      %s89 = sphi 0, %s86
      %s90 = sphi 0, %s89
      %s106 = sphi 0, %s90
      %s112 = sphi 0, %s114
      %s115 = sphi 0, %s112
      %s116 = sphi 0, %s115
      %s132 = sphi 0, %s116
      %s136 = sphi 0, %s136
      %s138 = sphi 0, %s136
      %s139 = sphi 0, %s138
      %s153 = sphi 0, %s139
      %s157 = sphi 0, %s157
      %s159 = sphi 0, %s157
      %s160 = sphi 0, %s159
      %s174 = sphi 0, %s160
      %s178 = sphi 0, %s178
      %s180 = sphi 0, %s178
      %s181 = sphi 0, %s180
      %s195 = sphi 0, %s181
      %s199 = sphi 0, %s199
      %s201 = sphi 0, %s199
      %s202 = sphi 0, %s201
      %s216 = sphi 0, %s202
      %s220 = sphi 0, %s220
      %s222 = sphi 0, %s220
      %s223 = sphi 0, %s222
      %s237 = sphi 0, %s223
      %s241 = sphi 0, %s241
      %s243 = sphi 0, %s241
      %s244 = sphi 0, %s243
      %s258 = sphi 0, %s244
      %s262 = sphi 0, %s262
      %s264 = sphi 0, %s262
      %s265 = sphi 0, %s264
      %s279 = sphi 0, %s265
      %s283 = sphi 0, %s283
      %s285 = sphi 0, %s283
      %s286 = sphi 0, %s285
      %s300 = sphi 0, %s286
      %s304 = sphi 0, %s304
      %s306 = sphi 0, %s304
      %s307 = sphi 0, %s306
      %s321 = sphi 0, %s307
      %s327 = sphi 0, %s329
      %s330 = sphi 0, %s327
      %s331 = sphi 0, %s330
      %s347 = sphi 0, %s331
    $region4: #{gated_gcn_forward.1} parent=1 // loop_header_branch
      %27 = sbr.rel (%p25) target = $region8
    $region5: #{gated_gcn_forward.1} parent=1 // loop_body
      %s29 = ssub.s32 %s24, 1
      %s30 = ssub.s32 %s24, 2
      %s31 = sadd.s32 %s24, 1
      %s32 = ssub.s32 %s24, %s31
      %p33 = scmp.eq.s32.totalorder %s32, 0
      %s35 = sadd.s32 %s34, 1
      %s36 = scalar_select %p33, %s34, %s35
      %p39 = pneg %p33
      %p40 = scmp.eq.s32.totalorder %s24, 1
      %p41 = por %p39, %p40
      %p42 = scmp.ne.s32.totalorder %s34, %s37
      %p43 = scmp.eq.s32.totalorder %s24, 0
      %p44 = por %p42, %p43
      %p45 = scmp.ne.s32.totalorder %s34, %s37
      %p46 = scmp.eq.s32.totalorder %s29, 1
      %p47 = por %p45, %p46
      %p48 = scmp.ne.s32.totalorder %s37, %s38
      %p49 = scmp.eq.s32.totalorder %s29, 0
      %p50 = por %p48, %p49
      %p51 = scmp.ne.s32.totalorder %s37, %s38
      %p52 = scmp.eq.s32.totalorder %s30, 1
      %p53 = por %p51, %p52
      %p55 = scmp.ne.s32.totalorder %s38, %s54
      %p56 = scmp.eq.s32.totalorder %s30, 0
      %p57 = por %p55, %p56
      %s58 = ssub.s32 %s24, %s31
      %p59 = scmp.eq.s32.totalorder %s58, 0
      %s61 = sadd.s32 %s60, 1
      %s62 = scalar_select %p59, %s60, %s61
      %p65 = pneg %p59
      %p66 = scmp.eq.s32.totalorder %s24, 1
      %p67 = por %p65, %p66
      %p68 = scmp.ne.s32.totalorder %s60, %s63
      %p69 = scmp.eq.s32.totalorder %s24, 0
      %p70 = por %p68, %p69
      %p71 = scmp.ne.s32.totalorder %s60, %s63
      %p72 = scmp.eq.s32.totalorder %s29, 1
      %p73 = por %p71, %p72
      %p74 = scmp.ne.s32.totalorder %s63, %s64
      %p75 = scmp.eq.s32.totalorder %s29, 0
      %p76 = por %p74, %p75
      %p77 = scmp.ne.s32.totalorder %s63, %s64
      %p78 = scmp.eq.s32.totalorder %s30, 1
      %p79 = por %p77, %p78
      %p81 = scmp.ne.s32.totalorder %s64, %s80
      %p82 = scmp.eq.s32.totalorder %s30, 0
      %p83 = por %p81, %p82
      %s84 = ssub.s32 %s24, %s31
      %p85 = scmp.eq.s32.totalorder %s84, 0
      %s87 = sadd.s32 %s86, 1
      %s88 = scalar_select %p85, %s86, %s87
      %p91 = pneg %p85
      %p92 = scmp.eq.s32.totalorder %s24, 1
      %p93 = por %p91, %p92
      %p94 = scmp.ne.s32.totalorder %s86, %s89
      %p95 = scmp.eq.s32.totalorder %s24, 0
      %p96 = por %p94, %p95
      %p97 = scmp.ne.s32.totalorder %s86, %s89
      %p98 = scmp.eq.s32.totalorder %s29, 1
      %p99 = por %p97, %p98
      %p100 = scmp.ne.s32.totalorder %s89, %s90
      %p101 = scmp.eq.s32.totalorder %s29, 0
      %p102 = por %p100, %p101
      %p103 = scmp.ne.s32.totalorder %s89, %s90
      %p104 = scmp.eq.s32.totalorder %s30, 1
      %p105 = por %p103, %p104
      %p107 = scmp.ne.s32.totalorder %s90, %s106
      %p108 = scmp.eq.s32.totalorder %s30, 0
      %p109 = por %p107, %p108
      %s110 = ssub.s32 %s24, %s31
      %p111 = scmp.eq.s32.totalorder %s110, 0
      %s113 = sadd.s32 %s112, 1
      %s114 = scalar_select %p111, %s112, %s113
      %p117 = pneg %p111
      %p118 = scmp.eq.s32.totalorder %s24, 1
      %p119 = por %p117, %p118
      %p120 = scmp.ne.s32.totalorder %s112, %s115
      %p121 = scmp.eq.s32.totalorder %s24, 0
      %p122 = por %p120, %p121
      %p123 = scmp.ne.s32.totalorder %s112, %s115
      %p124 = scmp.eq.s32.totalorder %s29, 1
      %p125 = por %p123, %p124
      %p126 = scmp.ne.s32.totalorder %s115, %s116
      %p127 = scmp.eq.s32.totalorder %s29, 0
      %p128 = por %p126, %p127
      %p129 = scmp.ne.s32.totalorder %s115, %s116
      %p130 = scmp.eq.s32.totalorder %s30, 1
      %p131 = por %p129, %p130
      %p133 = scmp.ne.s32.totalorder %s116, %s132
      %p134 = scmp.eq.s32.totalorder %s30, 0
      %p135 = por %p133, %p134
      %s137 = sadd.s32 %s136, 1
      %p140 = scmp.eq.s32.totalorder %s24, 1
      %p141 = scmp.ne.s32.totalorder %s136, %s138
      %p142 = scmp.eq.s32.totalorder %s24, 0
      %p143 = por %p141, %p142
      %p144 = scmp.ne.s32.totalorder %s136, %s138
      %p145 = scmp.eq.s32.totalorder %s29, 1
      %p146 = por %p144, %p145
      %p147 = scmp.ne.s32.totalorder %s138, %s139
      %p148 = scmp.eq.s32.totalorder %s29, 0
      %p149 = por %p147, %p148
      %p150 = scmp.ne.s32.totalorder %s138, %s139
      %p151 = scmp.eq.s32.totalorder %s30, 1
      %p152 = por %p150, %p151
      %p154 = scmp.ne.s32.totalorder %s139, %s153
      %p155 = scmp.eq.s32.totalorder %s30, 0
      %p156 = por %p154, %p155
      %s158 = sadd.s32 %s157, 1
      %p161 = scmp.eq.s32.totalorder %s24, 1
      %p162 = scmp.ne.s32.totalorder %s157, %s159
      %p163 = scmp.eq.s32.totalorder %s24, 0
      %p164 = por %p162, %p163
      %p165 = scmp.ne.s32.totalorder %s157, %s159
      %p166 = scmp.eq.s32.totalorder %s29, 1
      %p167 = por %p165, %p166
      %p168 = scmp.ne.s32.totalorder %s159, %s160
      %p169 = scmp.eq.s32.totalorder %s29, 0
      %p170 = por %p168, %p169
      %p171 = scmp.ne.s32.totalorder %s159, %s160
      %p172 = scmp.eq.s32.totalorder %s30, 1
      %p173 = por %p171, %p172
      %p175 = scmp.ne.s32.totalorder %s160, %s174
      %p176 = scmp.eq.s32.totalorder %s30, 0
      %p177 = por %p175, %p176
      %s179 = sadd.s32 %s178, 1
      %p182 = scmp.eq.s32.totalorder %s24, 1
      %p183 = scmp.ne.s32.totalorder %s178, %s180
      %p184 = scmp.eq.s32.totalorder %s24, 0
      %p185 = por %p183, %p184
      %p186 = scmp.ne.s32.totalorder %s178, %s180
      %p187 = scmp.eq.s32.totalorder %s29, 1
      %p188 = por %p186, %p187
      %p189 = scmp.ne.s32.totalorder %s180, %s181
      %p190 = scmp.eq.s32.totalorder %s29, 0
      %p191 = por %p189, %p190
      %p192 = scmp.ne.s32.totalorder %s180, %s181
      %p193 = scmp.eq.s32.totalorder %s30, 1
      %p194 = por %p192, %p193
      %p196 = scmp.ne.s32.totalorder %s181, %s195
      %p197 = scmp.eq.s32.totalorder %s30, 0
      %p198 = por %p196, %p197
      %s200 = sadd.s32 %s199, 1
      %p203 = scmp.eq.s32.totalorder %s24, 1
      %p204 = scmp.ne.s32.totalorder %s199, %s201
      %p205 = scmp.eq.s32.totalorder %s24, 0
      %p206 = por %p204, %p205
      %p207 = scmp.ne.s32.totalorder %s199, %s201
      %p208 = scmp.eq.s32.totalorder %s29, 1
      %p209 = por %p207, %p208
      %p210 = scmp.ne.s32.totalorder %s201, %s202
      %p211 = scmp.eq.s32.totalorder %s29, 0
      %p212 = por %p210, %p211
      %p213 = scmp.ne.s32.totalorder %s201, %s202
      %p214 = scmp.eq.s32.totalorder %s30, 1
      %p215 = por %p213, %p214
      %p217 = scmp.ne.s32.totalorder %s202, %s216
      %p218 = scmp.eq.s32.totalorder %s30, 0
      %p219 = por %p217, %p218
      %s221 = sadd.s32 %s220, 1
      %p224 = scmp.eq.s32.totalorder %s24, 1
      %p225 = scmp.ne.s32.totalorder %s220, %s222
      %p226 = scmp.eq.s32.totalorder %s24, 0
      %p227 = por %p225, %p226
      %p228 = scmp.ne.s32.totalorder %s220, %s222
      %p229 = scmp.eq.s32.totalorder %s29, 1
      %p230 = por %p228, %p229
      %p231 = scmp.ne.s32.totalorder %s222, %s223
      %p232 = scmp.eq.s32.totalorder %s29, 0
      %p233 = por %p231, %p232
      %p234 = scmp.ne.s32.totalorder %s222, %s223
      %p235 = scmp.eq.s32.totalorder %s30, 1
      %p236 = por %p234, %p235
      %p238 = scmp.ne.s32.totalorder %s223, %s237
      %p239 = scmp.eq.s32.totalorder %s30, 0
      %p240 = por %p238, %p239
      %s242 = sadd.s32 %s241, 1
      %p245 = scmp.eq.s32.totalorder %s24, 1
      %p246 = scmp.ne.s32.totalorder %s241, %s243
      %p247 = scmp.eq.s32.totalorder %s24, 0
      %p248 = por %p246, %p247
      %p249 = scmp.ne.s32.totalorder %s241, %s243
      %p250 = scmp.eq.s32.totalorder %s29, 1
      %p251 = por %p249, %p250
      %p252 = scmp.ne.s32.totalorder %s243, %s244
      %p253 = scmp.eq.s32.totalorder %s29, 0
      %p254 = por %p252, %p253
      %p255 = scmp.ne.s32.totalorder %s243, %s244
      %p256 = scmp.eq.s32.totalorder %s30, 1
      %p257 = por %p255, %p256
      %p259 = scmp.ne.s32.totalorder %s244, %s258
      %p260 = scmp.eq.s32.totalorder %s30, 0
      %p261 = por %p259, %p260
      %s263 = sadd.s32 %s262, 1
      %p266 = scmp.eq.s32.totalorder %s24, 1
      %p267 = scmp.ne.s32.totalorder %s262, %s264
      %p268 = scmp.eq.s32.totalorder %s24, 0
      %p269 = por %p267, %p268
      %p270 = scmp.ne.s32.totalorder %s262, %s264
      %p271 = scmp.eq.s32.totalorder %s29, 1
      %p272 = por %p270, %p271
      %p273 = scmp.ne.s32.totalorder %s264, %s265
      %p274 = scmp.eq.s32.totalorder %s29, 0
      %p275 = por %p273, %p274
      %p276 = scmp.ne.s32.totalorder %s264, %s265
      %p277 = scmp.eq.s32.totalorder %s30, 1
      %p278 = por %p276, %p277
      %p280 = scmp.ne.s32.totalorder %s265, %s279
      %p281 = scmp.eq.s32.totalorder %s30, 0
      %p282 = por %p280, %p281
      %s284 = sadd.s32 %s283, 1
      %p287 = scmp.eq.s32.totalorder %s24, 1
      %p288 = scmp.ne.s32.totalorder %s283, %s285
      %p289 = scmp.eq.s32.totalorder %s24, 0
      %p290 = por %p288, %p289
      %p291 = scmp.ne.s32.totalorder %s283, %s285
      %p292 = scmp.eq.s32.totalorder %s29, 1
      %p293 = por %p291, %p292
      %p294 = scmp.ne.s32.totalorder %s285, %s286
      %p295 = scmp.eq.s32.totalorder %s29, 0
      %p296 = por %p294, %p295
      %p297 = scmp.ne.s32.totalorder %s285, %s286
      %p298 = scmp.eq.s32.totalorder %s30, 1
      %p299 = por %p297, %p298
      %p301 = scmp.ne.s32.totalorder %s286, %s300
      %p302 = scmp.eq.s32.totalorder %s30, 0
      %p303 = por %p301, %p302
      %s305 = sadd.s32 %s304, 1
      %p308 = scmp.eq.s32.totalorder %s24, 1
      %p309 = scmp.ne.s32.totalorder %s304, %s306
      %p310 = scmp.eq.s32.totalorder %s24, 0
      %p311 = por %p309, %p310
      %p312 = scmp.ne.s32.totalorder %s304, %s306
      %p313 = scmp.eq.s32.totalorder %s29, 1
      %p314 = por %p312, %p313
      %p315 = scmp.ne.s32.totalorder %s306, %s307
      %p316 = scmp.eq.s32.totalorder %s29, 0
      %p317 = por %p315, %p316
      %p318 = scmp.ne.s32.totalorder %s306, %s307
      %p319 = scmp.eq.s32.totalorder %s30, 1
      %p320 = por %p318, %p319
      %p322 = scmp.ne.s32.totalorder %s307, %s321
      %p323 = scmp.eq.s32.totalorder %s30, 0
      %p324 = por %p322, %p323
      %s325 = ssub.s32 %s24, %s31
      %p326 = scmp.eq.s32.totalorder %s325, 0
      %s328 = sadd.s32 %s327, 1
      %s329 = scalar_select %p326, %s327, %s328
      %p332 = pneg %p326
      %p333 = scmp.eq.s32.totalorder %s24, 1
      %p334 = por %p332, %p333
      %p335 = scmp.ne.s32.totalorder %s327, %s330
      %p336 = scmp.eq.s32.totalorder %s24, 0
      %p337 = por %p335, %p336
      %p338 = scmp.ne.s32.totalorder %s327, %s330
      %p339 = scmp.eq.s32.totalorder %s29, 1
      %p340 = por %p338, %p339
      %p341 = scmp.ne.s32.totalorder %s330, %s331
      %p342 = scmp.eq.s32.totalorder %s29, 0
      %p343 = por %p341, %p342
      %p344 = scmp.ne.s32.totalorder %s330, %s331
      %p345 = scmp.eq.s32.totalorder %s30, 1
      %p346 = por %p344, %p345
      %p348 = scmp.ne.s32.totalorder %s331, %s347
      %p349 = scmp.eq.s32.totalorder %s30, 0
      %p350 = por %p348, %p349
      %p351 = scmp.le.s32.totalorder 1, %s24
      %p352 = scmp.lt.s32.totalorder %s24, 3
      %p353 = pnand %p351, %p352
      %p354 = pneg %p353
      // Predicated region
      $region9: #{gated_gcn_forward.1} parent=5 // pred_check
        _
      $region10: #{gated_gcn_forward.1} parent=5 // pred_check_branch
        %356 = sbr.rel (%p353) target = $region12
      $region11: #{gated_gcn_forward.1} parent=5 // pred_region
        %s357 = ssub.s32 %s24, 1
        // Predicated region
        $region13: #{gated_gcn_forward.1} parent=11 // pred_check
          %p358 = pneg %p149
        $region14: #{gated_gcn_forward.1} parent=11 // pred_check_branch
          %360 = sbr.rel (%p358) target = $region16
        $region15: #{gated_gcn_forward.1} parent=11 // pred_region
          _
        $region16: #{gated_gcn_forward.1} parent=11 // pred_fallthru
          _
        // Predicated region
        $region17: #{gated_gcn_forward.1} parent=11 // pred_check
          %p361 = pneg %p170
        $region18: #{gated_gcn_forward.1} parent=11 // pred_check_branch
          %363 = sbr.rel (%p361) target = $region20
        $region19: #{gated_gcn_forward.1} parent=11 // pred_region
          _
        $region20: #{gated_gcn_forward.1} parent=11 // pred_fallthru
          _
        // Predicated region
        $region21: #{gated_gcn_forward.1} parent=11 // pred_check
          %p364 = pneg %p191
        $region22: #{gated_gcn_forward.1} parent=11 // pred_check_branch
          %366 = sbr.rel (%p364) target = $region24
        $region23: #{gated_gcn_forward.1} parent=11 // pred_region
          _
        $region24: #{gated_gcn_forward.1} parent=11 // pred_fallthru
          _
        // Predicated region
        $region25: #{gated_gcn_forward.1} parent=11 // pred_check
          %p367 = pneg %p212
        $region26: #{gated_gcn_forward.1} parent=11 // pred_check_branch
          %369 = sbr.rel (%p367) target = $region28
        $region27: #{gated_gcn_forward.1} parent=11 // pred_region
          _
        $region28: #{gated_gcn_forward.1} parent=11 // pred_fallthru
          _
        // Predicated region
        $region29: #{gated_gcn_forward.1} parent=11 // pred_check
          %p370 = pneg %p233
        $region30: #{gated_gcn_forward.1} parent=11 // pred_check_branch
          %372 = sbr.rel (%p370) target = $region32
        $region31: #{gated_gcn_forward.1} parent=11 // pred_region
          _
        $region32: #{gated_gcn_forward.1} parent=11 // pred_fallthru
          _
        // Predicated region
        $region33: #{gated_gcn_forward.1} parent=11 // pred_check
          %p373 = pneg %p254
        $region34: #{gated_gcn_forward.1} parent=11 // pred_check_branch
          %375 = sbr.rel (%p373) target = $region36
        $region35: #{gated_gcn_forward.1} parent=11 // pred_region
          _
        $region36: #{gated_gcn_forward.1} parent=11 // pred_fallthru
          _
        // Predicated region
        $region37: #{gated_gcn_forward.1} parent=11 // pred_check
          %p376 = pneg %p275
        $region38: #{gated_gcn_forward.1} parent=11 // pred_check_branch
          %378 = sbr.rel (%p376) target = $region40
        $region39: #{gated_gcn_forward.1} parent=11 // pred_region
          _
        $region40: #{gated_gcn_forward.1} parent=11 // pred_fallthru
          _
        // Predicated region
        $region41: #{gated_gcn_forward.1} parent=11 // pred_check
          %p379 = pneg %p296
        $region42: #{gated_gcn_forward.1} parent=11 // pred_check_branch
          %381 = sbr.rel (%p379) target = $region44
        $region43: #{gated_gcn_forward.1} parent=11 // pred_region
          _
        $region44: #{gated_gcn_forward.1} parent=11 // pred_fallthru
          _
      $region12: #{gated_gcn_forward.1} parent=5 // pred_fallthru
        _
      %p382 = scmp.lt.s32.totalorder %s24, 2
      // Predicated region
      $region45: #{gated_gcn_forward.1} parent=5 // pred_check
        %p383 = pneg %p382
      $region46: #{gated_gcn_forward.1} parent=5 // pred_check_branch
        %385 = sbr.rel (%p383) target = $region48
      $region47: #{gated_gcn_forward.1} parent=5 // pred_region
        // Predicated region
        $region49: #{gated_gcn_forward.1} parent=47 // pred_check
          %p386 = pneg %p44
        $region50: #{gated_gcn_forward.1} parent=47 // pred_check_branch
          %388 = sbr.rel (%p386) target = $region52
        $region51: #{gated_gcn_forward.1} parent=47 // pred_region
          %s389 = smul.u32 32, %s24
          %p390 = scmp.lt.s32.totalorder %s389, 63
          %s391 = scalar_select %p390, %s389, 63
          %s392 = smul.addr %s391, 4
          %s393 = scalar_lea.vmem %s0, %s392
          %s394 = smul.u32 32, %s24
        $region52: #{gated_gcn_forward.1} parent=47 // pred_fallthru
          _
        // Predicated region
        $region53: #{gated_gcn_forward.1} parent=47 // pred_check
          %p395 = pneg %p70
        $region54: #{gated_gcn_forward.1} parent=47 // pred_check_branch
          %397 = sbr.rel (%p395) target = $region56
        $region55: #{gated_gcn_forward.1} parent=47 // pred_region
          %s398 = smul.u32 32, %s24
          %p399 = scmp.lt.s32.totalorder %s398, 63
          %s400 = scalar_select %p399, %s398, 63
          %s401 = smul.addr %s400, 4
          %s402 = scalar_lea.vmem %s1, %s401
          %s403 = smul.u32 32, %s24
        $region56: #{gated_gcn_forward.1} parent=47 // pred_fallthru
          _
        // Predicated region
        $region57: #{gated_gcn_forward.1} parent=47 // pred_check
          %p404 = pneg %p96
        $region58: #{gated_gcn_forward.1} parent=47 // pred_check_branch
          %406 = sbr.rel (%p404) target = $region60
        $region59: #{gated_gcn_forward.1} parent=47 // pred_region
          %s407 = smul.u32 32, %s24
          %p408 = scmp.lt.s32.totalorder %s407, 63
          %s409 = scalar_select %p408, %s407, 63
          %s410 = smul.addr %s409, 4
          %s411 = scalar_lea.vmem %s2, %s410
          %s412 = smul.u32 32, %s24
        $region60: #{gated_gcn_forward.1} parent=47 // pred_fallthru
          _
        // Predicated region
        $region61: #{gated_gcn_forward.1} parent=47 // pred_check
          %p413 = pneg %p122
        $region62: #{gated_gcn_forward.1} parent=47 // pred_check_branch
          %415 = sbr.rel (%p413) target = $region64
        $region63: #{gated_gcn_forward.1} parent=47 // pred_region
          %s416 = smul.u32 32, %s24
          %p417 = scmp.lt.s32.totalorder %s416, 63
          %s418 = scalar_select %p417, %s416, 63
          %s419 = smul.addr %s418, 8
          %s420 = scalar_lea.vmem %s3, %s419
          %s421 = smul.u32 32, %s24
        $region64: #{gated_gcn_forward.1} parent=47 // pred_fallthru
          _
      $region48: #{gated_gcn_forward.1} parent=5 // pred_fallthru
        _
      %p422 = scmp.le.s32.totalorder 1, %s24
      %p423 = scmp.lt.s32.totalorder %s24, 3
      %p424 = pnand %p422, %p423
      %p425 = pneg %p424
      // Predicated region
      $region65: #{gated_gcn_forward.1} parent=5 // pred_check
        _
      $region66: #{gated_gcn_forward.1} parent=5 // pred_check_branch
        %427 = sbr.rel (%p424) target = $region68
      $region67: #{gated_gcn_forward.1} parent=5 // pred_region
        %s428 = ssub.s32 %s24, 1
        %s429 = smul.u32 32, %s29
        %p430 = scmp.lt.s32.totalorder %s429, 63
        %s431 = scalar_select %p430, %s429, 63
        %s432 = smul.addr %s431, 4
        %s433 = scalar_lea.vmem %s0, %s432
        %p434 = pneg %p50
        %p435 = pneg %p47
        %s436 = smul.u32 32, %s29
        %p437 = scmp.lt.s32.totalorder %s436, 63
        %s438 = scalar_select %p437, %s436, 63
        %s439 = smul.addr %s438, 4
        %s440 = scalar_lea.vmem %s1, %s439
        %p441 = pneg %p76
        %p442 = pneg %p73
        %s443 = smul.u32 32, %s29
        %p444 = scmp.lt.s32.totalorder %s443, 63
        %s445 = scalar_select %p444, %s443, 63
        %s446 = smul.addr %s445, 4
        %s447 = scalar_lea.vmem %s2, %s446
        %p448 = pneg %p102
        %p449 = pneg %p99
        %s450 = smul.u32 32, %s29
        %p451 = scmp.lt.s32.totalorder %s450, 63
        %s452 = scalar_select %p451, %s450, 63
        %s453 = smul.addr %s452, 8
        %s454 = scalar_lea.vmem %s3, %s453
        %p455 = pneg %p128
        %p456 = pneg %p125
        %p457 = pneg %p149
        %p458 = pneg %p146
        %p459 = pneg %p170
        %p460 = pneg %p167
        %p461 = pneg %p191
        %p462 = pneg %p188
        %p463 = pneg %p212
        %p464 = pneg %p209
        %p465 = pneg %p233
        %p466 = pneg %p230
        %p467 = pneg %p254
        %p468 = pneg %p251
        %p469 = pneg %p275
        %p470 = pneg %p272
        %p471 = pneg %p296
        %p472 = pneg %p293
        %p473 = pneg %p317
        %p474 = pneg %p314
        %p475 = pneg %p343
        %p476 = pneg %p340
        %s477 = sand.u32 %s330, 1
        %s478 = scalar_lea.sflag [#allocation6], %s477
        %s479 = sand.u32 %s330, 1
        %s480 = smul.addr %s479, 128
        %s481 = scalar_lea.vmem [#allocation5], %s480
        %s482 = smul.u32 32, %s29
        %p483 = scmp.lt.s32.totalorder %s482, 63
        %s484 = scalar_select %p483, %s482, 63
        %s485 = smul.addr %s484, 4
        %s486 = scalar_lea.vmem %s0, %s485
        %s487 = smul.u32 32, %s29
        %s488 = smul.u32 32, %s29
        %p489 = scmp.lt.s32.totalorder %s488, 63
        %s490 = scalar_select %p489, %s488, 63
        %s491 = smul.addr %s490, 4
        %s492 = scalar_lea.vmem %s1, %s491
        %s493 = smul.u32 32, %s29
        %s494 = smul.u32 32, %s29
        %p495 = scmp.lt.s32.totalorder %s494, 63
        %s496 = scalar_select %p495, %s494, 63
        %s497 = smul.addr %s496, 4
        %s498 = scalar_lea.vmem %s2, %s497
        %s499 = smul.u32 32, %s29
        %s500 = smul.u32 32, %s29
        %p501 = scmp.lt.s32.totalorder %s500, 63
        %s502 = scalar_select %p501, %s500, 63
        %s503 = smul.addr %s502, 8
        %s504 = scalar_lea.vmem %s3, %s503
        %s505 = smul.u32 32, %s29
        %s506 = smul.u32 32, %s29
        %p508 = scmp.eq.s32.totalorder %s29, 0
        // Predicated region
        $region69: #{gated_gcn_forward.1} parent=67 // pred_check
          %p509 = pneg %p508
        $region70: #{gated_gcn_forward.1} parent=67 // pred_check_branch
          %511 = sbr.rel (%p509) target = $region72
        $region71: #{gated_gcn_forward.1} parent=67 // pred_region
          %512 = vst [vmem:[#allocation2] sm:$0xff] 0.0
          %513 = vst [vmem:[#allocation2 + $0x8] sm:$0xff] 0.0
          %514 = vst [vmem:[#allocation2 + $0x10] sm:$0xff] 0.0
          %515 = vst [vmem:[#allocation2 + $0x18] sm:$0xff] 0.0
          %516 = vst [vmem:[#allocation2 + $0x20] sm:$0xff] 0.0
          %517 = vst [vmem:[#allocation2 + $0x28] sm:$0xff] 0.0
          %518 = vst [vmem:[#allocation2 + $0x30] sm:$0xff] 0.0
          %519 = vst [vmem:[#allocation2 + $0x38] sm:$0xff] 0.0
          %520 = vst [vmem:[#allocation2 + $0x40] sm:$0xff] 0.0
          %521 = vst [vmem:[#allocation2 + $0x48] sm:$0xff] 0.0
          %522 = vst [vmem:[#allocation2 + $0x50] sm:$0xff] 0.0
          %523 = vst [vmem:[#allocation2 + $0x58] sm:$0xff] 0.0
          %524 = vst [vmem:[#allocation2 + $0x60] sm:$0xff] 0.0
          %525 = vst [vmem:[#allocation2 + $0x68] sm:$0xff] 0.0
          %526 = vst [vmem:[#allocation2 + $0x70] sm:$0xff] 0.0
          %527 = vst [vmem:[#allocation2 + $0x78] sm:$0xff] 0.0
        $region72: #{gated_gcn_forward.1} parent=67 // pred_fallthru
          _
        %v528 = vld [vmem:[%s492] sm:$0xf]
        %v529 = vld [vmem:[%s492 + $0x4] sm:$0xf]
        %v530 = vld [vmem:[%s492 + $0x8] sm:$0xf]
        %v531 = vld [vmem:[%s492 + $0xc] sm:$0xf]
        %v532 = vld [vmem:[%s492 + $0x10] sm:$0xf]
        %v533 = vld [vmem:[%s492 + $0x14] sm:$0xf]
        %v534 = vld [vmem:[%s492 + $0x18] sm:$0xf]
        %v535 = vld [vmem:[%s492 + $0x1c] sm:$0xf]
        %v536 = vld [vmem:[%s492 + $0x20] sm:$0xf]
        %v537 = vld [vmem:[%s492 + $0x24] sm:$0xf]
        %v538 = vld [vmem:[%s492 + $0x28] sm:$0xf]
        %v539 = vld [vmem:[%s492 + $0x2c] sm:$0xf]
        %v540 = vld [vmem:[%s492 + $0x30] sm:$0xf]
        %v541 = vld [vmem:[%s492 + $0x34] sm:$0xf]
        %v542 = vld [vmem:[%s492 + $0x38] sm:$0xf]
        %v543 = vld [vmem:[%s492 + $0x3c] sm:$0xf]
        %v544 = vld [vmem:[%s492 + $0x40] sm:$0xf]
        %v545 = vld [vmem:[%s492 + $0x44] sm:$0xf]
        %v546 = vld [vmem:[%s492 + $0x48] sm:$0xf]
        %v547 = vld [vmem:[%s492 + $0x4c] sm:$0xf]
        %v548 = vld [vmem:[%s492 + $0x50] sm:$0xf]
        %v549 = vld [vmem:[%s492 + $0x54] sm:$0xf]
        %v550 = vld [vmem:[%s492 + $0x58] sm:$0xf]
        %v551 = vld [vmem:[%s492 + $0x5c] sm:$0xf]
        %v552 = vld [vmem:[%s492 + $0x60] sm:$0xf]
        %v553 = vld [vmem:[%s492 + $0x64] sm:$0xf]
        %v554 = vld [vmem:[%s492 + $0x68] sm:$0xf]
        %v555 = vld [vmem:[%s492 + $0x6c] sm:$0xf]
        %v556 = vld [vmem:[%s492 + $0x70] sm:$0xf]
        %v557 = vld [vmem:[%s492 + $0x74] sm:$0xf]
        %v558 = vld [vmem:[%s492 + $0x78] sm:$0xf]
        %v559 = vld [vmem:[%s492 + $0x7c] sm:$0xf]
        %v560 = vld [vmem:[%s498] sm:$0xf]
        %v561 = vld [vmem:[%s498 + $0x4] sm:$0xf]
        %v562 = vld [vmem:[%s498 + $0x8] sm:$0xf]
        %v563 = vld [vmem:[%s498 + $0xc] sm:$0xf]
        %v564 = vld [vmem:[%s498 + $0x10] sm:$0xf]
        %v565 = vld [vmem:[%s498 + $0x14] sm:$0xf]
        %v566 = vld [vmem:[%s498 + $0x18] sm:$0xf]
        %v567 = vld [vmem:[%s498 + $0x1c] sm:$0xf]
        %v568 = vld [vmem:[%s498 + $0x20] sm:$0xf]
        %v569 = vld [vmem:[%s498 + $0x24] sm:$0xf]
        %v570 = vld [vmem:[%s498 + $0x28] sm:$0xf]
        %v571 = vld [vmem:[%s498 + $0x2c] sm:$0xf]
        %v572 = vld [vmem:[%s498 + $0x30] sm:$0xf]
        %v573 = vld [vmem:[%s498 + $0x34] sm:$0xf]
        %v574 = vld [vmem:[%s498 + $0x38] sm:$0xf]
        %v575 = vld [vmem:[%s498 + $0x3c] sm:$0xf]
        %v576 = vld [vmem:[%s498 + $0x40] sm:$0xf]
        %v577 = vld [vmem:[%s498 + $0x44] sm:$0xf]
        %v578 = vld [vmem:[%s498 + $0x48] sm:$0xf]
        %v579 = vld [vmem:[%s498 + $0x4c] sm:$0xf]
        %v580 = vld [vmem:[%s498 + $0x50] sm:$0xf]
        %v581 = vld [vmem:[%s498 + $0x54] sm:$0xf]
        %v582 = vld [vmem:[%s498 + $0x58] sm:$0xf]
        %v583 = vld [vmem:[%s498 + $0x5c] sm:$0xf]
        %v584 = vld [vmem:[%s498 + $0x60] sm:$0xf]
        %v585 = vld [vmem:[%s498 + $0x64] sm:$0xf]
        %v586 = vld [vmem:[%s498 + $0x68] sm:$0xf]
        %v587 = vld [vmem:[%s498 + $0x6c] sm:$0xf]
        %v588 = vld [vmem:[%s498 + $0x70] sm:$0xf]
        %v589 = vld [vmem:[%s498 + $0x74] sm:$0xf]
        %v590 = vld [vmem:[%s498 + $0x78] sm:$0xf]
        %v591 = vld [vmem:[%s498 + $0x7c] sm:$0xf]
        %v592 = vld [vmem:[%s486] sm:$0xf]
        %v593 = vld [vmem:[%s486 + $0x4] sm:$0xf]
        %v594 = vld [vmem:[%s486 + $0x8] sm:$0xf]
        %v595 = vld [vmem:[%s486 + $0xc] sm:$0xf]
        %v596 = vld [vmem:[%s486 + $0x10] sm:$0xf]
        %v597 = vld [vmem:[%s486 + $0x14] sm:$0xf]
        %v598 = vld [vmem:[%s486 + $0x18] sm:$0xf]
        %v599 = vld [vmem:[%s486 + $0x1c] sm:$0xf]
        %v600 = vld [vmem:[%s486 + $0x20] sm:$0xf]
        %v601 = vld [vmem:[%s486 + $0x24] sm:$0xf]
        %v602 = vld [vmem:[%s486 + $0x28] sm:$0xf]
        %v603 = vld [vmem:[%s486 + $0x2c] sm:$0xf]
        %v604 = vld [vmem:[%s486 + $0x30] sm:$0xf]
        %v605 = vld [vmem:[%s486 + $0x34] sm:$0xf]
        %v606 = vld [vmem:[%s486 + $0x38] sm:$0xf]
        %v607 = vld [vmem:[%s486 + $0x3c] sm:$0xf]
        %v608 = vld [vmem:[%s486 + $0x40] sm:$0xf]
        %v609 = vld [vmem:[%s486 + $0x44] sm:$0xf]
        %v610 = vld [vmem:[%s486 + $0x48] sm:$0xf]
        %v611 = vld [vmem:[%s486 + $0x4c] sm:$0xf]
        %v612 = vld [vmem:[%s486 + $0x50] sm:$0xf]
        %v613 = vld [vmem:[%s486 + $0x54] sm:$0xf]
        %v614 = vld [vmem:[%s486 + $0x58] sm:$0xf]
        %v615 = vld [vmem:[%s486 + $0x5c] sm:$0xf]
        %v616 = vld [vmem:[%s486 + $0x60] sm:$0xf]
        %v617 = vld [vmem:[%s486 + $0x64] sm:$0xf]
        %v618 = vld [vmem:[%s486 + $0x68] sm:$0xf]
        %v619 = vld [vmem:[%s486 + $0x6c] sm:$0xf]
        %v620 = vld [vmem:[%s486 + $0x70] sm:$0xf]
        %v621 = vld [vmem:[%s486 + $0x74] sm:$0xf]
        %v622 = vld [vmem:[%s486 + $0x78] sm:$0xf]
        %v623 = vld [vmem:[%s486 + $0x7c] sm:$0xf]
        %v656 = vunpack.c.l.b16 %v592
        %v657 = vunpack.c.l.b16 %v593
        %v658 = vunpack.c.l.b16 %v594
        %v659 = vunpack.c.l.b16 %v595
        %v660 = vunpack.c.l.b16 %v596
        %v661 = vunpack.c.l.b16 %v597
        %v662 = vunpack.c.l.b16 %v598
        %v663 = vunpack.c.l.b16 %v599
        %v664 = vunpack.c.l.b16 %v600
        %v665 = vunpack.c.l.b16 %v601
        %v666 = vunpack.c.l.b16 %v602
        %v667 = vunpack.c.l.b16 %v603
        %v668 = vunpack.c.l.b16 %v604
        %v669 = vunpack.c.l.b16 %v605
        %v670 = vunpack.c.l.b16 %v606
        %v671 = vunpack.c.l.b16 %v607
        %v672 = vunpack.c.l.b16 %v608
        %v673 = vunpack.c.l.b16 %v609
        %v674 = vunpack.c.l.b16 %v610
        %v675 = vunpack.c.l.b16 %v611
        %v676 = vunpack.c.l.b16 %v612
        %v677 = vunpack.c.l.b16 %v613
        %v678 = vunpack.c.l.b16 %v614
        %v679 = vunpack.c.l.b16 %v615
        %v680 = vunpack.c.l.b16 %v616
        %v681 = vunpack.c.l.b16 %v617
        %v682 = vunpack.c.l.b16 %v618
        %v683 = vunpack.c.l.b16 %v619
        %v684 = vunpack.c.l.b16 %v620
        %v685 = vunpack.c.l.b16 %v621
        %v686 = vunpack.c.l.b16 %v622
        %v687 = vunpack.c.l.b16 %v623
        %v688 = vpack.c.b16 %v657, %v656
        %v689 = vpack.c.b16 %v659, %v658
        %v690 = vpack.c.b16 %v661, %v660
        %v691 = vpack.c.b16 %v663, %v662
        %v692 = vpack.c.b16 %v665, %v664
        %v693 = vpack.c.b16 %v667, %v666
        %v694 = vpack.c.b16 %v669, %v668
        %v695 = vpack.c.b16 %v671, %v670
        %v696 = vpack.c.b16 %v673, %v672
        %v697 = vpack.c.b16 %v675, %v674
        %v698 = vpack.c.b16 %v677, %v676
        %v699 = vpack.c.b16 %v679, %v678
        %v700 = vpack.c.b16 %v681, %v680
        %v701 = vpack.c.b16 %v683, %v682
        %v702 = vpack.c.b16 %v685, %v684
        %v703 = vpack.c.b16 %v687, %v686
        %v736 = vunpack.c.l.b16 %v528
        %v737 = vunpack.c.l.b16 %v529
        %v738 = vunpack.c.l.b16 %v530
        %v739 = vunpack.c.l.b16 %v531
        %v740 = vunpack.c.l.b16 %v532
        %v741 = vunpack.c.l.b16 %v533
        %v742 = vunpack.c.l.b16 %v534
        %v743 = vunpack.c.l.b16 %v535
        %v744 = vunpack.c.l.b16 %v536
        %v745 = vunpack.c.l.b16 %v537
        %v746 = vunpack.c.l.b16 %v538
        %v747 = vunpack.c.l.b16 %v539
        %v748 = vunpack.c.l.b16 %v540
        %v749 = vunpack.c.l.b16 %v541
        %v750 = vunpack.c.l.b16 %v542
        %v751 = vunpack.c.l.b16 %v543
        %v752 = vunpack.c.l.b16 %v544
        %v753 = vunpack.c.l.b16 %v545
        %v754 = vunpack.c.l.b16 %v546
        %v755 = vunpack.c.l.b16 %v547
        %v756 = vunpack.c.l.b16 %v548
        %v757 = vunpack.c.l.b16 %v549
        %v758 = vunpack.c.l.b16 %v550
        %v759 = vunpack.c.l.b16 %v551
        %v760 = vunpack.c.l.b16 %v552
        %v761 = vunpack.c.l.b16 %v553
        %v762 = vunpack.c.l.b16 %v554
        %v763 = vunpack.c.l.b16 %v555
        %v764 = vunpack.c.l.b16 %v556
        %v765 = vunpack.c.l.b16 %v557
        %v766 = vunpack.c.l.b16 %v558
        %v767 = vunpack.c.l.b16 %v559
        %v768 = vpack.c.b16 %v737, %v736
        %v769 = vpack.c.b16 %v739, %v738
        %v770 = vpack.c.b16 %v741, %v740
        %v771 = vpack.c.b16 %v743, %v742
        %v772 = vpack.c.b16 %v745, %v744
        %v773 = vpack.c.b16 %v747, %v746
        %v774 = vpack.c.b16 %v749, %v748
        %v775 = vpack.c.b16 %v751, %v750
        %v776 = vpack.c.b16 %v753, %v752
        %v777 = vpack.c.b16 %v755, %v754
        %v778 = vpack.c.b16 %v757, %v756
        %v779 = vpack.c.b16 %v759, %v758
        %v780 = vpack.c.b16 %v761, %v760
        %v781 = vpack.c.b16 %v763, %v762
        %v782 = vpack.c.b16 %v765, %v764
        %v783 = vpack.c.b16 %v767, %v766
        %784 = vrot.lane.b32.xlu0 %v768, 64
        %v785 = vpop.permute.xlu0 %784
        %786 = vrot.lane.b32.xlu0 %v769, 64
        %v787 = vpop.permute.xlu0 %786
        %788 = vrot.lane.b32.xlu0 %v770, 64
        %v789 = vpop.permute.xlu0 %788
        %790 = vrot.lane.b32.xlu0 %v771, 64
        %v791 = vpop.permute.xlu0 %790
        %792 = vrot.lane.b32.xlu0 %v772, 64
        %v793 = vpop.permute.xlu0 %792
        %794 = vrot.lane.b32.xlu0 %v773, 64
        %v795 = vpop.permute.xlu0 %794
        %796 = vrot.lane.b32.xlu0 %v774, 64
        %v797 = vpop.permute.xlu0 %796
        %798 = vrot.lane.b32.xlu0 %v775, 64
        %v799 = vpop.permute.xlu0 %798
        %800 = vrot.lane.b32.xlu0 %v776, 64
        %v801 = vpop.permute.xlu0 %800
        %802 = vrot.lane.b32.xlu0 %v777, 64
        %v803 = vpop.permute.xlu0 %802
        %804 = vrot.lane.b32.xlu0 %v778, 64
        %v805 = vpop.permute.xlu0 %804
        %806 = vrot.lane.b32.xlu0 %v779, 64
        %v807 = vpop.permute.xlu0 %806
        %808 = vrot.lane.b32.xlu0 %v780, 64
        %v809 = vpop.permute.xlu0 %808
        %810 = vrot.lane.b32.xlu0 %v781, 64
        %v811 = vpop.permute.xlu0 %810
        %812 = vrot.lane.b32.xlu0 %v782, 64
        %v813 = vpop.permute.xlu0 %812
        %814 = vrot.lane.b32.xlu0 %v783, 64
        %v815 = vpop.permute.xlu0 %814
        %v848 = vunpack.c.l.b16 %v560
        %v849 = vunpack.c.l.b16 %v561
        %v850 = vunpack.c.l.b16 %v562
        %v851 = vunpack.c.l.b16 %v563
        %v852 = vunpack.c.l.b16 %v564
        %v853 = vunpack.c.l.b16 %v565
        %v854 = vunpack.c.l.b16 %v566
        %v855 = vunpack.c.l.b16 %v567
        %v856 = vunpack.c.l.b16 %v568
        %v857 = vunpack.c.l.b16 %v569
        %v858 = vunpack.c.l.b16 %v570
        %v859 = vunpack.c.l.b16 %v571
        %v860 = vunpack.c.l.b16 %v572
        %v861 = vunpack.c.l.b16 %v573
        %v862 = vunpack.c.l.b16 %v574
        %v863 = vunpack.c.l.b16 %v575
        %v864 = vunpack.c.l.b16 %v576
        %v865 = vunpack.c.l.b16 %v577
        %v866 = vunpack.c.l.b16 %v578
        %v867 = vunpack.c.l.b16 %v579
        %v868 = vunpack.c.l.b16 %v580
        %v869 = vunpack.c.l.b16 %v581
        %v870 = vunpack.c.l.b16 %v582
        %v871 = vunpack.c.l.b16 %v583
        %v872 = vunpack.c.l.b16 %v584
        %v873 = vunpack.c.l.b16 %v585
        %v874 = vunpack.c.l.b16 %v586
        %v875 = vunpack.c.l.b16 %v587
        %v876 = vunpack.c.l.b16 %v588
        %v877 = vunpack.c.l.b16 %v589
        %v878 = vunpack.c.l.b16 %v590
        %v879 = vunpack.c.l.b16 %v591
        %v880 = vpack.c.b16 %v849, %v848
        %v881 = vpack.c.b16 %v851, %v850
        %v882 = vpack.c.b16 %v853, %v852
        %v883 = vpack.c.b16 %v855, %v854
        %v884 = vpack.c.b16 %v857, %v856
        %v885 = vpack.c.b16 %v859, %v858
        %v886 = vpack.c.b16 %v861, %v860
        %v887 = vpack.c.b16 %v863, %v862
        %v888 = vpack.c.b16 %v865, %v864
        %v889 = vpack.c.b16 %v867, %v866
        %v890 = vpack.c.b16 %v869, %v868
        %v891 = vpack.c.b16 %v871, %v870
        %v892 = vpack.c.b16 %v873, %v872
        %v893 = vpack.c.b16 %v875, %v874
        %v894 = vpack.c.b16 %v877, %v876
        %v895 = vpack.c.b16 %v879, %v878
        %vm896 = vcmask 523264
        %v899 = vsel %vm896, %v688, %v785
        %v903 = vsel %vm896, %v689, %v787
        %v907 = vsel %vm896, %v690, %v789
        %v911 = vsel %vm896, %v691, %v791
        %v915 = vsel %vm896, %v692, %v793
        %v919 = vsel %vm896, %v693, %v795
        %v923 = vsel %vm896, %v694, %v797
        %v927 = vsel %vm896, %v695, %v799
        %v931 = vsel %vm896, %v696, %v801
        %v935 = vsel %vm896, %v697, %v803
        %v939 = vsel %vm896, %v698, %v805
        %v943 = vsel %vm896, %v699, %v807
        %v947 = vsel %vm896, %v700, %v809
        %v951 = vsel %vm896, %v701, %v811
        %v955 = vsel %vm896, %v702, %v813
        %v959 = vsel %vm896, %v703, %v815
        %v961 = vld [vmem:[%s4] sm:$0xf]
        %v962 = vld [vmem:[%s4 + $0x4] sm:$0xf]
        %v963 = vld [vmem:[%s4 + $0x8] sm:$0xf]
        %v964 = vld [vmem:[%s4 + $0xc] sm:$0xf]
        %v965 = vld [vmem:[%s4 + $0x10] sm:$0xf]
        %v966 = vld [vmem:[%s4 + $0x14] sm:$0xf]
        %v967 = vld [vmem:[%s4 + $0x18] sm:$0xf]
        %v968 = vld [vmem:[%s4 + $0x1c] sm:$0xf]
        %v969 = vld [vmem:[%s4 + $0x20] sm:$0xf]
        %v970 = vld [vmem:[%s4 + $0x24] sm:$0xf]
        %v971 = vld [vmem:[%s4 + $0x28] sm:$0xf]
        %v972 = vld [vmem:[%s4 + $0x2c] sm:$0xf]
        %v973 = vld [vmem:[%s4 + $0x30] sm:$0xf]
        %v974 = vld [vmem:[%s4 + $0x34] sm:$0xf]
        %v975 = vld [vmem:[%s4 + $0x38] sm:$0xf]
        %v976 = vld [vmem:[%s4 + $0x3c] sm:$0xf]
        %v977 = vld [vmem:[%s4 + $0x40] sm:$0xf]
        %v978 = vld [vmem:[%s4 + $0x44] sm:$0xf]
        %v979 = vld [vmem:[%s4 + $0x48] sm:$0xf]
        %v980 = vld [vmem:[%s4 + $0x4c] sm:$0xf]
        %v981 = vld [vmem:[%s4 + $0x50] sm:$0xf]
        %v982 = vld [vmem:[%s4 + $0x54] sm:$0xf]
        %v983 = vld [vmem:[%s4 + $0x58] sm:$0xf]
        %v984 = vld [vmem:[%s4 + $0x5c] sm:$0xf]
        %v1009 = vunpack.c.l.b16 %v961
        %v1010 = vunpack.c.l.b16 %v962
        %v1011 = vunpack.c.l.b16 %v963
        %v1012 = vunpack.c.l.b16 %v964
        %v1013 = vunpack.c.l.b16 %v965
        %v1014 = vunpack.c.l.b16 %v966
        %v1015 = vunpack.c.l.b16 %v967
        %v1016 = vunpack.c.l.b16 %v968
        %v1017 = vunpack.c.l.b16 %v969
        %v1018 = vunpack.c.l.b16 %v970
        %v1019 = vunpack.c.l.b16 %v971
        %v1020 = vunpack.c.l.b16 %v972
        %v1021 = vunpack.c.l.b16 %v973
        %v1022 = vunpack.c.l.b16 %v974
        %v1023 = vunpack.c.l.b16 %v975
        %v1024 = vunpack.c.l.b16 %v976
        %v1025 = vunpack.c.l.b16 %v977
        %v1026 = vunpack.c.l.b16 %v978
        %v1027 = vunpack.c.l.b16 %v979
        %v1028 = vunpack.c.l.b16 %v980
        %v1029 = vunpack.c.l.b16 %v981
        %v1030 = vunpack.c.l.b16 %v982
        %v1031 = vunpack.c.l.b16 %v983
        %v1032 = vunpack.c.l.b16 %v984
        %v1033 = vpack.c.b16 %v1010, %v1009
        %v1034 = vpack.c.b16 %v1012, %v1011
        %v1035 = vpack.c.b16 %v1014, %v1013
        %v1036 = vpack.c.b16 %v1016, %v1015
        %v1037 = vpack.c.b16 %v1018, %v1017
        %v1038 = vpack.c.b16 %v1020, %v1019
        %v1039 = vpack.c.b16 %v1022, %v1021
        %v1040 = vpack.c.b16 %v1024, %v1023
        %v1041 = vpack.c.b16 %v1026, %v1025
        %v1042 = vpack.c.b16 %v1028, %v1027
        %v1043 = vpack.c.b16 %v1030, %v1029
        %v1044 = vpack.c.b16 %v1032, %v1031
        %v1058 = vsel %vm896, %v880, 0
        %v1061 = vsel %vm896, %v881, 0
        %v1064 = vsel %vm896, %v882, 0
        %v1067 = vsel %vm896, %v883, 0
        %v1070 = vsel %vm896, %v884, 0
        %v1073 = vsel %vm896, %v885, 0
        %v1076 = vsel %vm896, %v886, 0
        %v1079 = vsel %vm896, %v887, 0
        %v1082 = vsel %vm896, %v888, 0
        %v1085 = vsel %vm896, %v889, 0
        %v1088 = vsel %vm896, %v890, 0
        %v1091 = vsel %vm896, %v891, 0
        %v1094 = vsel %vm896, %v892, 0
        %v1097 = vsel %vm896, %v893, 0
        %v1100 = vsel %vm896, %v894, 0
        %v1103 = vsel %vm896, %v895, 0
        %1105 = vmatprep.subr.bf16.mxu0 0
        %1106 = vmatpush1.bf16.msra.mxu0 %v1033
        %1107 = vmatprep.subr.bf16.mxu0 0
        %1108 = vmatpush1.bf16.msra.mxu0 %v1034
        %1109 = vmatprep.subr.bf16.mxu0 0
        %1110 = vmatpush1.bf16.msra.mxu0 %v1035
        %1111 = vmatprep.subr.bf16.mxu0 0
        %1112 = vmatpush1.bf16.msra.mxu0 %v1036
        %1113 = vmatprep.subr.bf16.mxu0 0
        %1114 = vmatpush1.bf16.msra.mxu0 %v1037
        %1115 = vmatprep.subr.bf16.mxu0 0
        %1116 = vmatpush1.bf16.msra.mxu0 %v1038
        %1117 = vmatprep.subr.bf16.mxu0 0
        %1118 = vmatpush1.bf16.msra.mxu0 %v1039
        %1119 = vmatprep.subr.bf16.mxu0 0
        %1120 = vmatpush1.bf16.msra.mxu0 %v1040
        %1121 = vmatprep.subr.bf16.mxu0 0
        %1122 = vmatpush1.bf16.msra.mxu0 %v1041
        %1123 = vmatprep.subr.bf16.mxu0 0
        %1124 = vmatpush1.bf16.msra.mxu0 %v1042
        %1125 = vmatprep.subr.bf16.mxu0 0
        %1126 = vmatpush1.bf16.msra.mxu0 %v1043
        %1127 = vmatprep.subr.bf16.mxu0 0
        %1128 = vmatpush1.bf16.msra.mxu0 %v1044
        %1129 = vmatprep.subr.bf16.mxu0 0
        %1130 = vmatpush1.bf16.msra.mxu0 0
        %1131 = vmatprep.subr.bf16.mxu0 0
        %1132 = vmatpush1.bf16.msra.mxu0 0
        %1133 = vmatprep.subr.bf16.mxu0 0
        %1134 = vmatpush1.bf16.msra.mxu0 0
        %1135 = vmatprep.subr.bf16.mxu0 0
        %1136 = vmatpush1.bf16.msra.mxu0 0
        %1137 = vmatprep.mubr.bf16.mxu0 %v1058
        %1138 = vmatmul.mubr.bf16.gmra.mrb[0].mxu0 %v899
        %v1139 = vpop.f32.mrb[0].mxu0
        %v1140 = vadd.f32 0.0, %v1139
        %v1141 = vpop.f32.mrb[0].mxu0
        %v1142 = vpop.f32.mrb[0].mxu0
        %v1143 = vadd.f32 0.0, %v1142
        %v1144 = vpop.f32.mrb[0].mxu0
        %1145 = vmatprep.mubr.bf16.mxu0 %v1061
        %1146 = vmatmul.mubr.bf16.gmra.mrb[0].mxu0 %v903
        %v1147 = vpop.f32.mrb[0].mxu0
        %v1148 = vadd.f32 0.0, %v1147
        %v1149 = vpop.f32.mrb[0].mxu0
        %v1150 = vpop.f32.mrb[0].mxu0
        %v1151 = vadd.f32 0.0, %v1150
        %v1152 = vpop.f32.mrb[0].mxu0
        %1153 = vmatprep.mubr.bf16.mxu0 %v1064
        %1154 = vmatmul.mubr.bf16.gmra.mrb[0].mxu0 %v907
        %v1155 = vpop.f32.mrb[0].mxu0
        %v1156 = vadd.f32 0.0, %v1155
        %v1157 = vpop.f32.mrb[0].mxu0
        %v1158 = vpop.f32.mrb[0].mxu0
        %v1159 = vadd.f32 0.0, %v1158
        %v1160 = vpop.f32.mrb[0].mxu0
        %1161 = vmatprep.mubr.bf16.mxu0 %v1067
        %1162 = vmatmul.mubr.bf16.gmra.mrb[0].mxu0 %v911
        %v1163 = vpop.f32.mrb[0].mxu0
        %v1164 = vadd.f32 0.0, %v1163
        %v1165 = vpop.f32.mrb[0].mxu0
        %v1166 = vpop.f32.mrb[0].mxu0
        %v1167 = vadd.f32 0.0, %v1166
        %v1168 = vpop.f32.mrb[0].mxu0
        %1169 = vmatprep.mubr.bf16.mxu0 %v1070
        %1170 = vmatmul.mubr.bf16.gmra.mrb[0].mxu0 %v915
        %v1171 = vpop.f32.mrb[0].mxu0
        %v1172 = vadd.f32 0.0, %v1171
        %v1173 = vpop.f32.mrb[0].mxu0
        %v1174 = vpop.f32.mrb[0].mxu0
        %v1175 = vadd.f32 0.0, %v1174
        %v1176 = vpop.f32.mrb[0].mxu0
        %1177 = vmatprep.mubr.bf16.mxu0 %v1073
        %1178 = vmatmul.mubr.bf16.gmra.mrb[0].mxu0 %v919
        %v1179 = vpop.f32.mrb[0].mxu0
        %v1180 = vadd.f32 0.0, %v1179
        %v1181 = vpop.f32.mrb[0].mxu0
        %v1182 = vpop.f32.mrb[0].mxu0
        %v1183 = vadd.f32 0.0, %v1182
        %v1184 = vpop.f32.mrb[0].mxu0
        %1185 = vmatprep.mubr.bf16.mxu0 %v1076
        %1186 = vmatmul.mubr.bf16.gmra.mrb[0].mxu0 %v923
        %v1187 = vpop.f32.mrb[0].mxu0
        %v1188 = vadd.f32 0.0, %v1187
        %v1189 = vpop.f32.mrb[0].mxu0
        %v1190 = vpop.f32.mrb[0].mxu0
        %v1191 = vadd.f32 0.0, %v1190
        %v1192 = vpop.f32.mrb[0].mxu0
        %1193 = vmatprep.mubr.bf16.mxu0 %v1079
        %1194 = vmatmul.mubr.bf16.gmra.mrb[0].mxu0 %v927
        %v1195 = vpop.f32.mrb[0].mxu0
        %v1196 = vadd.f32 0.0, %v1195
        %v1197 = vpop.f32.mrb[0].mxu0
        %v1198 = vpop.f32.mrb[0].mxu0
        %v1199 = vadd.f32 0.0, %v1198
        %v1200 = vpop.f32.mrb[0].mxu0
        %1201 = vmatprep.mubr.bf16.mxu0 %v1082
        %1202 = vmatmul.mubr.bf16.gmra.mrb[0].mxu0 %v931
        %v1203 = vpop.f32.mrb[0].mxu0
        %v1204 = vadd.f32 0.0, %v1203
        %v1205 = vpop.f32.mrb[0].mxu0
        %v1206 = vpop.f32.mrb[0].mxu0
        %v1207 = vadd.f32 0.0, %v1206
        %v1208 = vpop.f32.mrb[0].mxu0
        %1209 = vmatprep.mubr.bf16.mxu0 %v1085
        %1210 = vmatmul.mubr.bf16.gmra.mrb[0].mxu0 %v935
        %v1211 = vpop.f32.mrb[0].mxu0
        %v1212 = vadd.f32 0.0, %v1211
        %v1213 = vpop.f32.mrb[0].mxu0
        %v1214 = vpop.f32.mrb[0].mxu0
        %v1215 = vadd.f32 0.0, %v1214
        %v1216 = vpop.f32.mrb[0].mxu0
        %1217 = vmatprep.mubr.bf16.mxu0 %v1088
        %1218 = vmatmul.mubr.bf16.gmra.mrb[0].mxu0 %v939
        %v1219 = vpop.f32.mrb[0].mxu0
        %v1220 = vadd.f32 0.0, %v1219
        %v1221 = vpop.f32.mrb[0].mxu0
        %v1222 = vpop.f32.mrb[0].mxu0
        %v1223 = vadd.f32 0.0, %v1222
        %v1224 = vpop.f32.mrb[0].mxu0
        %1225 = vmatprep.mubr.bf16.mxu0 %v1091
        %1226 = vmatmul.mubr.bf16.gmra.mrb[0].mxu0 %v943
        %v1227 = vpop.f32.mrb[0].mxu0
        %v1228 = vadd.f32 0.0, %v1227
        %v1229 = vpop.f32.mrb[0].mxu0
        %v1230 = vpop.f32.mrb[0].mxu0
        %v1231 = vadd.f32 0.0, %v1230
        %v1232 = vpop.f32.mrb[0].mxu0
        %1233 = vmatprep.mubr.bf16.mxu0 %v1094
        %1234 = vmatmul.mubr.bf16.gmra.mrb[0].mxu0 %v947
        %v1235 = vpop.f32.mrb[0].mxu0
        %v1236 = vadd.f32 0.0, %v1235
        %v1237 = vpop.f32.mrb[0].mxu0
        %v1238 = vpop.f32.mrb[0].mxu0
        %v1239 = vadd.f32 0.0, %v1238
        %v1240 = vpop.f32.mrb[0].mxu0
        %1241 = vmatprep.mubr.bf16.mxu0 %v1097
        %1242 = vmatmul.mubr.bf16.gmra.mrb[0].mxu0 %v951
        %v1243 = vpop.f32.mrb[0].mxu0
        %v1244 = vadd.f32 0.0, %v1243
        %v1245 = vpop.f32.mrb[0].mxu0
        %v1246 = vpop.f32.mrb[0].mxu0
        %v1247 = vadd.f32 0.0, %v1246
        %v1248 = vpop.f32.mrb[0].mxu0
        %1249 = vmatprep.mubr.bf16.mxu0 %v1100
        %1250 = vmatmul.mubr.bf16.gmra.mrb[0].mxu0 %v955
        %v1251 = vpop.f32.mrb[0].mxu0
        %v1252 = vadd.f32 0.0, %v1251
        %v1253 = vpop.f32.mrb[0].mxu0
        %v1254 = vpop.f32.mrb[0].mxu0
        %v1255 = vadd.f32 0.0, %v1254
        %v1256 = vpop.f32.mrb[0].mxu0
        %1257 = vmatprep.mubr.bf16.mxu0 %v1103
        %1258 = vmatmul.mubr.bf16.gmra.mrb[0].mxu0 %v959
        %v1259 = vpop.f32.mrb[0].mxu0
        %v1260 = vadd.f32 0.0, %v1259
        %v1261 = vpop.f32.mrb[0].mxu0
        %v1262 = vpop.f32.mrb[0].mxu0
        %v1263 = vadd.f32 0.0, %v1262
        %v1264 = vpop.f32.mrb[0].mxu0
        %1265 = vdwg.mxu0
        %v1266 = vmax.f32 %v1140, 0.0
        %v1267 = vmax.f32 %v1143, 0.0
        %v1268 = vmax.f32 %v1148, 0.0
        %v1269 = vmax.f32 %v1151, 0.0
        %v1270 = vmax.f32 %v1156, 0.0
        %v1271 = vmax.f32 %v1159, 0.0
        %v1272 = vmax.f32 %v1164, 0.0
        %v1273 = vmax.f32 %v1167, 0.0
        %v1274 = vmax.f32 %v1172, 0.0
        %v1275 = vmax.f32 %v1175, 0.0
        %v1276 = vmax.f32 %v1180, 0.0
        %v1277 = vmax.f32 %v1183, 0.0
        %v1278 = vmax.f32 %v1188, 0.0
        %v1279 = vmax.f32 %v1191, 0.0
        %v1280 = vmax.f32 %v1196, 0.0
        %v1281 = vmax.f32 %v1199, 0.0
        %v1282 = vmax.f32 %v1204, 0.0
        %v1283 = vmax.f32 %v1207, 0.0
        %v1284 = vmax.f32 %v1212, 0.0
        %v1285 = vmax.f32 %v1215, 0.0
        %v1286 = vmax.f32 %v1220, 0.0
        %v1287 = vmax.f32 %v1223, 0.0
        %v1288 = vmax.f32 %v1228, 0.0
        %v1289 = vmax.f32 %v1231, 0.0
        %v1290 = vmax.f32 %v1236, 0.0
        %v1291 = vmax.f32 %v1239, 0.0
        %v1292 = vmax.f32 %v1244, 0.0
        %v1293 = vmax.f32 %v1247, 0.0
        %v1294 = vmax.f32 %v1252, 0.0
        %v1295 = vmax.f32 %v1255, 0.0
        %v1296 = vmax.f32 %v1260, 0.0
        %v1297 = vmax.f32 %v1263, 0.0
        %v1298 = vsub.f32 0.0, %v1266
        %v1299 = vsub.f32 0.0, %v1267
        %v1300 = vsub.f32 0.0, %v1268
        %v1301 = vsub.f32 0.0, %v1269
        %v1302 = vsub.f32 0.0, %v1270
        %v1303 = vsub.f32 0.0, %v1271
        %v1304 = vsub.f32 0.0, %v1272
        %v1305 = vsub.f32 0.0, %v1273
        %v1306 = vsub.f32 0.0, %v1274
        %v1307 = vsub.f32 0.0, %v1275
        %v1308 = vsub.f32 0.0, %v1276
        %v1309 = vsub.f32 0.0, %v1277
        %v1310 = vsub.f32 0.0, %v1278
        %v1311 = vsub.f32 0.0, %v1279
        %v1312 = vsub.f32 0.0, %v1280
        %v1313 = vsub.f32 0.0, %v1281
        %v1314 = vsub.f32 0.0, %v1282
        %v1315 = vsub.f32 0.0, %v1283
        %v1316 = vsub.f32 0.0, %v1284
        %v1317 = vsub.f32 0.0, %v1285
        %v1318 = vsub.f32 0.0, %v1286
        %v1319 = vsub.f32 0.0, %v1287
        %v1320 = vsub.f32 0.0, %v1288
        %v1321 = vsub.f32 0.0, %v1289
        %v1322 = vsub.f32 0.0, %v1290
        %v1323 = vsub.f32 0.0, %v1291
        %v1324 = vsub.f32 0.0, %v1292
        %v1325 = vsub.f32 0.0, %v1293
        %v1326 = vsub.f32 0.0, %v1294
        %v1327 = vsub.f32 0.0, %v1295
        %v1328 = vsub.f32 0.0, %v1296
        %v1329 = vsub.f32 0.0, %v1297
        %v1330 = vmul.f32 %v1298, 1.442695
        %v1331 = vpow.pop %v1330
        %v1332 = vmul.f32 %v1299, 1.442695
        %v1333 = vpow.pop %v1332
        %v1334 = vmul.f32 %v1300, 1.442695
        %v1335 = vpow.pop %v1334
        %v1336 = vmul.f32 %v1301, 1.442695
        %v1337 = vpow.pop %v1336
        %v1338 = vmul.f32 %v1302, 1.442695
        %v1339 = vpow.pop %v1338
        %v1340 = vmul.f32 %v1303, 1.442695
        %v1341 = vpow.pop %v1340
        %v1342 = vmul.f32 %v1304, 1.442695
        %v1343 = vpow.pop %v1342
        %v1344 = vmul.f32 %v1305, 1.442695
        %v1345 = vpow.pop %v1344
        %v1346 = vmul.f32 %v1306, 1.442695
        %v1347 = vpow.pop %v1346
        %v1348 = vmul.f32 %v1307, 1.442695
        %v1349 = vpow.pop %v1348
        %v1350 = vmul.f32 %v1308, 1.442695
        %v1351 = vpow.pop %v1350
        %v1352 = vmul.f32 %v1309, 1.442695
        %v1353 = vpow.pop %v1352
        %v1354 = vmul.f32 %v1310, 1.442695
        %v1355 = vpow.pop %v1354
        %v1356 = vmul.f32 %v1311, 1.442695
        %v1357 = vpow.pop %v1356
        %v1358 = vmul.f32 %v1312, 1.442695
        %v1359 = vpow.pop %v1358
        %v1360 = vmul.f32 %v1313, 1.442695
        %v1361 = vpow.pop %v1360
        %v1362 = vmul.f32 %v1314, 1.442695
        %v1363 = vpow.pop %v1362
        %v1364 = vmul.f32 %v1315, 1.442695
        %v1365 = vpow.pop %v1364
        %v1366 = vmul.f32 %v1316, 1.442695
        %v1367 = vpow.pop %v1366
        %v1368 = vmul.f32 %v1317, 1.442695
        %v1369 = vpow.pop %v1368
        %v1370 = vmul.f32 %v1318, 1.442695
        %v1371 = vpow.pop %v1370
        %v1372 = vmul.f32 %v1319, 1.442695
        %v1373 = vpow.pop %v1372
        %v1374 = vmul.f32 %v1320, 1.442695
        %v1375 = vpow.pop %v1374
        %v1376 = vmul.f32 %v1321, 1.442695
        %v1377 = vpow.pop %v1376
        %v1378 = vmul.f32 %v1322, 1.442695
        %v1379 = vpow.pop %v1378
        %v1380 = vmul.f32 %v1323, 1.442695
        %v1381 = vpow.pop %v1380
        %v1382 = vmul.f32 %v1324, 1.442695
        %v1383 = vpow.pop %v1382
        %v1384 = vmul.f32 %v1325, 1.442695
        %v1385 = vpow.pop %v1384
        %v1386 = vmul.f32 %v1326, 1.442695
        %v1387 = vpow.pop %v1386
        %v1388 = vmul.f32 %v1327, 1.442695
        %v1389 = vpow.pop %v1388
        %v1390 = vmul.f32 %v1328, 1.442695
        %v1391 = vpow.pop %v1390
        %v1392 = vmul.f32 %v1329, 1.442695
        %v1393 = vpow.pop %v1392
        %v1394 = vadd.f32 %v1331, 1.0
        %v1395 = vadd.f32 %v1333, 1.0
        %v1396 = vadd.f32 %v1335, 1.0
        %v1397 = vadd.f32 %v1337, 1.0
        %v1398 = vadd.f32 %v1339, 1.0
        %v1399 = vadd.f32 %v1341, 1.0
        %v1400 = vadd.f32 %v1343, 1.0
        %v1401 = vadd.f32 %v1345, 1.0
        %v1402 = vadd.f32 %v1347, 1.0
        %v1403 = vadd.f32 %v1349, 1.0
        %v1404 = vadd.f32 %v1351, 1.0
        %v1405 = vadd.f32 %v1353, 1.0
        %v1406 = vadd.f32 %v1355, 1.0
        %v1407 = vadd.f32 %v1357, 1.0
        %v1408 = vadd.f32 %v1359, 1.0
        %v1409 = vadd.f32 %v1361, 1.0
        %v1410 = vadd.f32 %v1363, 1.0
        %v1411 = vadd.f32 %v1365, 1.0
        %v1412 = vadd.f32 %v1367, 1.0
        %v1413 = vadd.f32 %v1369, 1.0
        %v1414 = vadd.f32 %v1371, 1.0
        %v1415 = vadd.f32 %v1373, 1.0
        %v1416 = vadd.f32 %v1375, 1.0
        %v1417 = vadd.f32 %v1377, 1.0
        %v1418 = vadd.f32 %v1379, 1.0
        %v1419 = vadd.f32 %v1381, 1.0
        %v1420 = vadd.f32 %v1383, 1.0
        %v1421 = vadd.f32 %v1385, 1.0
        %v1422 = vadd.f32 %v1387, 1.0
        %v1423 = vadd.f32 %v1389, 1.0
        %v1424 = vadd.f32 %v1391, 1.0
        %v1425 = vadd.f32 %v1393, 1.0
        %v1426 = vrcp.pop %v1394
        %v1427 = vrcp.pop %v1395
        %v1428 = vrcp.pop %v1396
        %v1429 = vrcp.pop %v1397
        %v1430 = vrcp.pop %v1398
        %v1431 = vrcp.pop %v1399
        %v1432 = vrcp.pop %v1400
        %v1433 = vrcp.pop %v1401
        %v1434 = vrcp.pop %v1402
        %v1435 = vrcp.pop %v1403
        %v1436 = vrcp.pop %v1404
        %v1437 = vrcp.pop %v1405
        %v1438 = vrcp.pop %v1406
        %v1439 = vrcp.pop %v1407
        %v1440 = vrcp.pop %v1408
        %v1441 = vrcp.pop %v1409
        %v1442 = vrcp.pop %v1410
        %v1443 = vrcp.pop %v1411
        %v1444 = vrcp.pop %v1412
        %v1445 = vrcp.pop %v1413
        %v1446 = vrcp.pop %v1414
        %v1447 = vrcp.pop %v1415
        %v1448 = vrcp.pop %v1416
        %v1449 = vrcp.pop %v1417
        %v1450 = vrcp.pop %v1418
        %v1451 = vrcp.pop %v1419
        %v1452 = vrcp.pop %v1420
        %v1453 = vrcp.pop %v1421
        %v1454 = vrcp.pop %v1422
        %v1455 = vrcp.pop %v1423
        %v1456 = vrcp.pop %v1424
        %v1457 = vrcp.pop %v1425
        %v1458 = vld [vmem:[%s5] sm:$0xf]
        %v1459 = vld [vmem:[%s5 + $0x4] sm:$0xf]
        %v1460 = vld [vmem:[%s5 + $0x8] sm:$0xf]
        %v1461 = vld [vmem:[%s5 + $0xc] sm:$0xf]
        %v1462 = vld [vmem:[%s5 + $0x10] sm:$0xf]
        %v1463 = vld [vmem:[%s5 + $0x14] sm:$0xf]
        %v1464 = vld [vmem:[%s5 + $0x18] sm:$0xf]
        %v1465 = vld [vmem:[%s5 + $0x1c] sm:$0xf]
        %v1474 = vunpack.c.l.b16 %v1458
        %v1475 = vunpack.c.l.b16 %v1459
        %v1476 = vunpack.c.l.b16 %v1460
        %v1477 = vunpack.c.l.b16 %v1461
        %v1478 = vunpack.c.l.b16 %v1462
        %v1479 = vunpack.c.l.b16 %v1463
        %v1480 = vunpack.c.l.b16 %v1464
        %v1481 = vunpack.c.l.b16 %v1465
        %v1482 = vpack.c.b16 %v1475, %v1474
        %v1483 = vpack.c.b16 %v1477, %v1476
        %v1484 = vpack.c.b16 %v1479, %v1478
        %v1485 = vpack.c.b16 %v1481, %v1480
        %v1491 = vsel %vm896, %v768, 0
        %v1494 = vsel %vm896, %v769, 0
        %v1497 = vsel %vm896, %v770, 0
        %v1500 = vsel %vm896, %v771, 0
        %v1503 = vsel %vm896, %v772, 0
        %v1506 = vsel %vm896, %v773, 0
        %v1509 = vsel %vm896, %v774, 0
        %v1512 = vsel %vm896, %v775, 0
        %v1515 = vsel %vm896, %v776, 0
        %v1518 = vsel %vm896, %v777, 0
        %v1521 = vsel %vm896, %v778, 0
        %v1524 = vsel %vm896, %v779, 0
        %v1527 = vsel %vm896, %v780, 0
        %v1530 = vsel %vm896, %v781, 0
        %v1533 = vsel %vm896, %v782, 0
        %v1536 = vsel %vm896, %v783, 0
        %1538 = vmatprep.subr.bf16.mxu0 0
        %1539 = vmatpush1.bf16.msra.mxu0 %v1482
        %1540 = vmatprep.subr.bf16.mxu0 0
        %1541 = vmatpush1.bf16.msra.mxu0 %v1483
        %1542 = vmatprep.subr.bf16.mxu0 0
        %1543 = vmatpush1.bf16.msra.mxu0 %v1484
        %1544 = vmatprep.subr.bf16.mxu0 0
        %1545 = vmatpush1.bf16.msra.mxu0 %v1485
        %1546 = vmatprep.subr.bf16.mxu0 0
        %1547 = vmatpush1.bf16.msra.mxu0 0
        %1548 = vmatprep.subr.bf16.mxu0 0
        %1549 = vmatpush1.bf16.msra.mxu0 0
        %1550 = vmatprep.subr.bf16.mxu0 0
        %1551 = vmatpush1.bf16.msra.mxu0 0
        %1552 = vmatprep.subr.bf16.mxu0 0
        %1553 = vmatpush1.bf16.msra.mxu0 0
        %1554 = vmatprep.subr.bf16.mxu0 0
        %1555 = vmatpush1.bf16.msra.mxu0 0
        %1556 = vmatprep.subr.bf16.mxu0 0
        %1557 = vmatpush1.bf16.msra.mxu0 0
        %1558 = vmatprep.subr.bf16.mxu0 0
        %1559 = vmatpush1.bf16.msra.mxu0 0
        %1560 = vmatprep.subr.bf16.mxu0 0
        %1561 = vmatpush1.bf16.msra.mxu0 0
        %1562 = vmatprep.subr.bf16.mxu0 0
        %1563 = vmatpush1.bf16.msra.mxu0 0
        %1564 = vmatprep.subr.bf16.mxu0 0
        %1565 = vmatpush1.bf16.msra.mxu0 0
        %1566 = vmatprep.subr.bf16.mxu0 0
        %1567 = vmatpush1.bf16.msra.mxu0 0
        %1568 = vmatprep.subr.bf16.mxu0 0
        %1569 = vmatpush1.bf16.msra.mxu0 0
        %1570 = vmatprep.mubr.bf16.mxu0 0
        %1571 = vmatmul.mubr.bf16.gmra.mrb[0].mxu0 %v1491
        %v1572 = vpop.f32.mrb[0].mxu0
        %v1573 = vadd.f32 0.0, %v1572
        %v1574 = vpop.f32.mrb[0].mxu0
        %v1575 = vpop.f32.mrb[0].mxu0
        %v1576 = vadd.f32 0.0, %v1575
        %v1577 = vpop.f32.mrb[0].mxu0
        %1578 = vmatprep.mubr.bf16.mxu0 0
        %1579 = vmatmul.mubr.bf16.gmra.mrb[0].mxu0 %v1494
        %v1580 = vpop.f32.mrb[0].mxu0
        %v1581 = vadd.f32 0.0, %v1580
        %v1582 = vpop.f32.mrb[0].mxu0
        %v1583 = vpop.f32.mrb[0].mxu0
        %v1584 = vadd.f32 0.0, %v1583
        %v1585 = vpop.f32.mrb[0].mxu0
        %1586 = vmatprep.mubr.bf16.mxu0 0
        %1587 = vmatmul.mubr.bf16.gmra.mrb[0].mxu0 %v1497
        %v1588 = vpop.f32.mrb[0].mxu0
        %v1589 = vadd.f32 0.0, %v1588
        %v1590 = vpop.f32.mrb[0].mxu0
        %v1591 = vpop.f32.mrb[0].mxu0
        %v1592 = vadd.f32 0.0, %v1591
        %v1593 = vpop.f32.mrb[0].mxu0
        %1594 = vmatprep.mubr.bf16.mxu0 0
        %1595 = vmatmul.mubr.bf16.gmra.mrb[0].mxu0 %v1500
        %v1596 = vpop.f32.mrb[0].mxu0
        %v1597 = vadd.f32 0.0, %v1596
        %v1598 = vpop.f32.mrb[0].mxu0
        %v1599 = vpop.f32.mrb[0].mxu0
        %v1600 = vadd.f32 0.0, %v1599
        %v1601 = vpop.f32.mrb[0].mxu0
        %1602 = vmatprep.mubr.bf16.mxu0 0
        %1603 = vmatmul.mubr.bf16.gmra.mrb[0].mxu0 %v1503
        %v1604 = vpop.f32.mrb[0].mxu0
        %v1605 = vadd.f32 0.0, %v1604
        %v1606 = vpop.f32.mrb[0].mxu0
        %v1607 = vpop.f32.mrb[0].mxu0
        %v1608 = vadd.f32 0.0, %v1607
        %v1609 = vpop.f32.mrb[0].mxu0
        %1610 = vmatprep.mubr.bf16.mxu0 0
        %1611 = vmatmul.mubr.bf16.gmra.mrb[0].mxu0 %v1506
        %v1612 = vpop.f32.mrb[0].mxu0
        %v1613 = vadd.f32 0.0, %v1612
        %v1614 = vpop.f32.mrb[0].mxu0
        %v1615 = vpop.f32.mrb[0].mxu0
        %v1616 = vadd.f32 0.0, %v1615
        %v1617 = vpop.f32.mrb[0].mxu0
        %1618 = vmatprep.mubr.bf16.mxu0 0
        %1619 = vmatmul.mubr.bf16.gmra.mrb[0].mxu0 %v1509
        %v1620 = vpop.f32.mrb[0].mxu0
        %v1621 = vadd.f32 0.0, %v1620
        %v1622 = vpop.f32.mrb[0].mxu0
        %v1623 = vpop.f32.mrb[0].mxu0
        %v1624 = vadd.f32 0.0, %v1623
        %v1625 = vpop.f32.mrb[0].mxu0
        %1626 = vmatprep.mubr.bf16.mxu0 0
        %1627 = vmatmul.mubr.bf16.gmra.mrb[0].mxu0 %v1512
        %v1628 = vpop.f32.mrb[0].mxu0
        %v1629 = vadd.f32 0.0, %v1628
        %v1630 = vpop.f32.mrb[0].mxu0
        %v1631 = vpop.f32.mrb[0].mxu0
        %v1632 = vadd.f32 0.0, %v1631
        %v1633 = vpop.f32.mrb[0].mxu0
        %1634 = vmatprep.mubr.bf16.mxu0 0
        %1635 = vmatmul.mubr.bf16.gmra.mrb[0].mxu0 %v1515
        %v1636 = vpop.f32.mrb[0].mxu0
        %v1637 = vadd.f32 0.0, %v1636
        %v1638 = vpop.f32.mrb[0].mxu0
        %v1639 = vpop.f32.mrb[0].mxu0
        %v1640 = vadd.f32 0.0, %v1639
        %v1641 = vpop.f32.mrb[0].mxu0
        %1642 = vmatprep.mubr.bf16.mxu0 0
        %1643 = vmatmul.mubr.bf16.gmra.mrb[0].mxu0 %v1518
        %v1644 = vpop.f32.mrb[0].mxu0
        %v1645 = vadd.f32 0.0, %v1644
        %v1646 = vpop.f32.mrb[0].mxu0
        %v1647 = vpop.f32.mrb[0].mxu0
        %v1648 = vadd.f32 0.0, %v1647
        %v1649 = vpop.f32.mrb[0].mxu0
        %1650 = vmatprep.mubr.bf16.mxu0 0
        %1651 = vmatmul.mubr.bf16.gmra.mrb[0].mxu0 %v1521
        %v1652 = vpop.f32.mrb[0].mxu0
        %v1653 = vadd.f32 0.0, %v1652
        %v1654 = vpop.f32.mrb[0].mxu0
        %v1655 = vpop.f32.mrb[0].mxu0
        %v1656 = vadd.f32 0.0, %v1655
        %v1657 = vpop.f32.mrb[0].mxu0
        %1658 = vmatprep.mubr.bf16.mxu0 0
        %1659 = vmatmul.mubr.bf16.gmra.mrb[0].mxu0 %v1524
        %v1660 = vpop.f32.mrb[0].mxu0
        %v1661 = vadd.f32 0.0, %v1660
        %v1662 = vpop.f32.mrb[0].mxu0
        %v1663 = vpop.f32.mrb[0].mxu0
        %v1664 = vadd.f32 0.0, %v1663
        %v1665 = vpop.f32.mrb[0].mxu0
        %1666 = vmatprep.mubr.bf16.mxu0 0
        %1667 = vmatmul.mubr.bf16.gmra.mrb[0].mxu0 %v1527
        %v1668 = vpop.f32.mrb[0].mxu0
        %v1669 = vadd.f32 0.0, %v1668
        %v1670 = vpop.f32.mrb[0].mxu0
        %v1671 = vpop.f32.mrb[0].mxu0
        %v1672 = vadd.f32 0.0, %v1671
        %v1673 = vpop.f32.mrb[0].mxu0
        %1674 = vmatprep.mubr.bf16.mxu0 0
        %1675 = vmatmul.mubr.bf16.gmra.mrb[0].mxu0 %v1530
        %v1676 = vpop.f32.mrb[0].mxu0
        %v1677 = vadd.f32 0.0, %v1676
        %v1678 = vpop.f32.mrb[0].mxu0
        %v1679 = vpop.f32.mrb[0].mxu0
        %v1680 = vadd.f32 0.0, %v1679
        %v1681 = vpop.f32.mrb[0].mxu0
        %1682 = vmatprep.mubr.bf16.mxu0 0
        %1683 = vmatmul.mubr.bf16.gmra.mrb[0].mxu0 %v1533
        %v1684 = vpop.f32.mrb[0].mxu0
        %v1685 = vadd.f32 0.0, %v1684
        %v1686 = vpop.f32.mrb[0].mxu0
        %v1687 = vpop.f32.mrb[0].mxu0
        %v1688 = vadd.f32 0.0, %v1687
        %v1689 = vpop.f32.mrb[0].mxu0
        %1690 = vmatprep.mubr.bf16.mxu0 0
        %1691 = vmatmul.mubr.bf16.gmra.mrb[0].mxu0 %v1536
        %v1692 = vpop.f32.mrb[0].mxu0
        %v1693 = vadd.f32 0.0, %v1692
        %v1694 = vpop.f32.mrb[0].mxu0
        %v1695 = vpop.f32.mrb[0].mxu0
        %v1696 = vadd.f32 0.0, %v1695
        %v1697 = vpop.f32.mrb[0].mxu0
        %1698 = vdwg.mxu0
        %v1699 = vmul.f32 %v1426, %v1573
        %v1700 = vmul.f32 %v1427, %v1576
        %v1701 = vmul.f32 %v1428, %v1581
        %v1702 = vmul.f32 %v1429, %v1584
        %v1703 = vmul.f32 %v1430, %v1589
        %v1704 = vmul.f32 %v1431, %v1592
        %v1705 = vmul.f32 %v1432, %v1597
        %v1706 = vmul.f32 %v1433, %v1600
        %v1707 = vmul.f32 %v1434, %v1605
        %v1708 = vmul.f32 %v1435, %v1608
        %v1709 = vmul.f32 %v1436, %v1613
        %v1710 = vmul.f32 %v1437, %v1616
        %v1711 = vmul.f32 %v1438, %v1621
        %v1712 = vmul.f32 %v1439, %v1624
        %v1713 = vmul.f32 %v1440, %v1629
        %v1714 = vmul.f32 %v1441, %v1632
        %v1715 = vmul.f32 %v1442, %v1637
        %v1716 = vmul.f32 %v1443, %v1640
        %v1717 = vmul.f32 %v1444, %v1645
        %v1718 = vmul.f32 %v1445, %v1648
        %v1719 = vmul.f32 %v1446, %v1653
        %v1720 = vmul.f32 %v1447, %v1656
        %v1721 = vmul.f32 %v1448, %v1661
        %v1722 = vmul.f32 %v1449, %v1664
        %v1723 = vmul.f32 %v1450, %v1669
        %v1724 = vmul.f32 %v1451, %v1672
        %v1725 = vmul.f32 %v1452, %v1677
        %v1726 = vmul.f32 %v1453, %v1680
        %v1727 = vmul.f32 %v1454, %v1685
        %v1728 = vmul.f32 %v1455, %v1688
        %v1729 = vmul.f32 %v1456, %v1693
        %v1730 = vmul.f32 %v1457, %v1696
        %v1731 = vpack.c.bf16 %v1700, %v1699
        %v1732 = vpack.c.bf16 %v1427, %v1426
        %v1733 = vpack.c.bf16 %v1702, %v1701
        %v1734 = vpack.c.bf16 %v1429, %v1428
        %v1735 = vpack.c.bf16 %v1704, %v1703
        %v1736 = vpack.c.bf16 %v1431, %v1430
        %v1737 = vpack.c.bf16 %v1706, %v1705
        %v1738 = vpack.c.bf16 %v1433, %v1432
        %v1739 = vpack.c.bf16 %v1708, %v1707
        %v1740 = vpack.c.bf16 %v1435, %v1434
        %v1741 = vpack.c.bf16 %v1710, %v1709
        %v1742 = vpack.c.bf16 %v1437, %v1436
        %v1743 = vpack.c.bf16 %v1712, %v1711
        %v1744 = vpack.c.bf16 %v1439, %v1438
        %v1745 = vpack.c.bf16 %v1714, %v1713
        %v1746 = vpack.c.bf16 %v1441, %v1440
        %v1747 = vpack.c.bf16 %v1716, %v1715
        %v1748 = vpack.c.bf16 %v1443, %v1442
        %v1749 = vpack.c.bf16 %v1718, %v1717
        %v1750 = vpack.c.bf16 %v1445, %v1444
        %v1751 = vpack.c.bf16 %v1720, %v1719
        %v1752 = vpack.c.bf16 %v1447, %v1446
        %v1753 = vpack.c.bf16 %v1722, %v1721
        %v1754 = vpack.c.bf16 %v1449, %v1448
        %v1755 = vpack.c.bf16 %v1724, %v1723
        %v1756 = vpack.c.bf16 %v1451, %v1450
        %v1757 = vpack.c.bf16 %v1726, %v1725
        %v1758 = vpack.c.bf16 %v1453, %v1452
        %v1759 = vpack.c.bf16 %v1728, %v1727
        %v1760 = vpack.c.bf16 %v1455, %v1454
        %v1761 = vpack.c.bf16 %v1730, %v1729
        %v1762 = vpack.c.bf16 %v1457, %v1456
        %v1763 = vld [vmem:[#allocation2] sm:$0xff]
        %v1764 = vld [vmem:[#allocation2 + $0x8] sm:$0xff]
        %v1765 = vld [vmem:[#allocation2 + $0x10] sm:$0xff]
        %v1766 = vld [vmem:[#allocation2 + $0x18] sm:$0xff]
        %v1767 = vld [vmem:[#allocation2 + $0x20] sm:$0xff]
        %v1768 = vld [vmem:[#allocation2 + $0x28] sm:$0xff]
        %v1769 = vld [vmem:[#allocation2 + $0x30] sm:$0xff]
        %v1770 = vld [vmem:[#allocation2 + $0x38] sm:$0xff]
        %v1771 = vld [vmem:[#allocation2 + $0x40] sm:$0xff]
        %v1772 = vld [vmem:[#allocation2 + $0x48] sm:$0xff]
        %v1773 = vld [vmem:[#allocation2 + $0x50] sm:$0xff]
        %v1774 = vld [vmem:[#allocation2 + $0x58] sm:$0xff]
        %v1775 = vld [vmem:[#allocation2 + $0x60] sm:$0xff]
        %v1776 = vld [vmem:[#allocation2 + $0x68] sm:$0xff]
        %v1777 = vld [vmem:[#allocation2 + $0x70] sm:$0xff]
        %v1778 = vld [vmem:[#allocation2 + $0x78] sm:$0xff]
        %1795 = vxpose.xlu0.c.b16.start [1/8] %v880, 128
        %1796 = vxpose.xlu0.c.b16.cont [2/8] %v881, 128
        %1797 = vxpose.xlu0.c.b16.cont [3/8] %v882, 128
        %1798 = vxpose.xlu0.c.b16.cont [4/8] %v883, 128
        %1799 = vxpose.xlu0.c.b16.cont [5/8] %v884, 128
        %1800 = vxpose.xlu0.c.b16.cont [6/8] %v885, 128
        %1801 = vxpose.xlu0.c.b16.cont [7/8] %v886, 128
        %1802 = vxpose.xlu0.c.b16.end [8/8] %v887, 128
        %v1803 = vpop.trf.xlu0
        %v1804 = vpop.trf.xlu0
        %v1805 = vpop.trf.xlu0
        %v1806 = vpop.trf.xlu0
        %v1807 = vpop.trf.xlu0
        %v1808 = vpop.trf.xlu0
        %v1809 = vpop.trf.xlu0
        %v1810 = vpop.trf.xlu0
        %1811 = vxpose.xlu0.c.b16.start [1/8] %v888, 128
        %1812 = vxpose.xlu0.c.b16.cont [2/8] %v889, 128
        %1813 = vxpose.xlu0.c.b16.cont [3/8] %v890, 128
        %1814 = vxpose.xlu0.c.b16.cont [4/8] %v891, 128
        %1815 = vxpose.xlu0.c.b16.cont [5/8] %v892, 128
        %1816 = vxpose.xlu0.c.b16.cont [6/8] %v893, 128
        %1817 = vxpose.xlu0.c.b16.cont [7/8] %v894, 128
        %1818 = vxpose.xlu0.c.b16.end [8/8] %v895, 128
        %v1819 = vpop.trf.xlu0
        %v1820 = vpop.trf.xlu0
        %v1821 = vpop.trf.xlu0
        %v1822 = vpop.trf.xlu0
        %v1823 = vpop.trf.xlu0
        %v1824 = vpop.trf.xlu0
        %v1825 = vpop.trf.xlu0
        %v1826 = vpop.trf.xlu0
        %1827 = vmatprep.subr.bf16.mxu0 %v1732
        %1828 = vmatpush1.bf16.msra.mxu0 %v1731
        %1829 = vmatprep.subr.bf16.mxu0 %v1734
        %1830 = vmatpush1.bf16.msra.mxu0 %v1733
        %1831 = vmatprep.subr.bf16.mxu0 %v1736
        %1832 = vmatpush1.bf16.msra.mxu0 %v1735
        %1833 = vmatprep.subr.bf16.mxu0 %v1738
        %1834 = vmatpush1.bf16.msra.mxu0 %v1737
        %1835 = vmatprep.subr.bf16.mxu0 %v1740
        %1836 = vmatpush1.bf16.msra.mxu0 %v1739
        %1837 = vmatprep.subr.bf16.mxu0 %v1742
        %1838 = vmatpush1.bf16.msra.mxu0 %v1741
        %1839 = vmatprep.subr.bf16.mxu0 %v1744
        %1840 = vmatpush1.bf16.msra.mxu0 %v1743
        %1841 = vmatprep.subr.bf16.mxu0 %v1746
        %1842 = vmatpush1.bf16.msra.mxu0 %v1745
        %1843 = vmatprep.subr.bf16.mxu0 %v1748
        %1844 = vmatpush1.bf16.msra.mxu0 %v1747
        %1845 = vmatprep.subr.bf16.mxu0 %v1750
        %1846 = vmatpush1.bf16.msra.mxu0 %v1749
        %1847 = vmatprep.subr.bf16.mxu0 %v1752
        %1848 = vmatpush1.bf16.msra.mxu0 %v1751
        %1849 = vmatprep.subr.bf16.mxu0 %v1754
        %1850 = vmatpush1.bf16.msra.mxu0 %v1753
        %1851 = vmatprep.subr.bf16.mxu0 %v1756
        %1852 = vmatpush1.bf16.msra.mxu0 %v1755
        %1853 = vmatprep.subr.bf16.mxu0 %v1758
        %1854 = vmatpush1.bf16.msra.mxu0 %v1757
        %1855 = vmatprep.subr.bf16.mxu0 %v1760
        %1856 = vmatpush1.bf16.msra.mxu0 %v1759
        %1857 = vmatprep.subr.bf16.mxu0 %v1762
        %1858 = vmatpush1.bf16.msra.mxu0 %v1761
        %1859 = vmatprep.mubr.bf16.mxu0 %v1819
        %1860 = vmatmul.mubr.bf16.gmra.mrb[0].mxu0 %v1803
        %v1861 = vpop.f32.mrb[0].mxu0
        %v1862 = vadd.f32 0.0, %v1861
        %v1863 = vpop.f32.mrb[0].mxu0
        %v1864 = vadd.f32 0.0, %v1863
        %v1865 = vpop.f32.mrb[0].mxu0
        %v1866 = vadd.f32 0.0, %v1865
        %v1867 = vpop.f32.mrb[0].mxu0
        %v1868 = vadd.f32 0.0, %v1867
        %1869 = vmatprep.mubr.bf16.mxu0 %v1820
        %1870 = vmatmul.mubr.bf16.gmra.mrb[0].mxu0 %v1804
        %v1871 = vpop.f32.mrb[0].mxu0
        %v1872 = vadd.f32 0.0, %v1871
        %v1873 = vpop.f32.mrb[0].mxu0
        %v1874 = vadd.f32 0.0, %v1873
        %v1875 = vpop.f32.mrb[0].mxu0
        %v1876 = vadd.f32 0.0, %v1875
        %v1877 = vpop.f32.mrb[0].mxu0
        %v1878 = vadd.f32 0.0, %v1877
        %1879 = vmatprep.mubr.bf16.mxu0 %v1821
        %1880 = vmatmul.mubr.bf16.gmra.mrb[0].mxu0 %v1805
        %v1881 = vpop.f32.mrb[0].mxu0
        %v1882 = vadd.f32 0.0, %v1881
        %v1883 = vpop.f32.mrb[0].mxu0
        %v1884 = vadd.f32 0.0, %v1883
        %v1885 = vpop.f32.mrb[0].mxu0
        %v1886 = vadd.f32 0.0, %v1885
        %v1887 = vpop.f32.mrb[0].mxu0
        %v1888 = vadd.f32 0.0, %v1887
        %1889 = vmatprep.mubr.bf16.mxu0 %v1822
        %1890 = vmatmul.mubr.bf16.gmra.mrb[0].mxu0 %v1806
        %v1891 = vpop.f32.mrb[0].mxu0
        %v1892 = vadd.f32 0.0, %v1891
        %v1893 = vpop.f32.mrb[0].mxu0
        %v1894 = vadd.f32 0.0, %v1893
        %v1895 = vpop.f32.mrb[0].mxu0
        %v1896 = vadd.f32 0.0, %v1895
        %v1897 = vpop.f32.mrb[0].mxu0
        %v1898 = vadd.f32 0.0, %v1897
        %1899 = vdwg.mxu0
        %v1900 = vadd.f32 %v1763, %v1862
        %v1901 = vadd.f32 %v1764, %v1864
        %v1902 = vadd.f32 %v1765, %v1866
        %v1903 = vadd.f32 %v1766, %v1868
        %v1904 = vadd.f32 %v1767, %v1872
        %v1905 = vadd.f32 %v1768, %v1874
        %v1906 = vadd.f32 %v1769, %v1876
        %v1907 = vadd.f32 %v1770, %v1878
        %v1908 = vadd.f32 %v1771, %v1882
        %v1909 = vadd.f32 %v1772, %v1884
        %v1910 = vadd.f32 %v1773, %v1886
        %v1911 = vadd.f32 %v1774, %v1888
        %v1912 = vadd.f32 %v1775, %v1892
        %v1913 = vadd.f32 %v1776, %v1894
        %v1914 = vadd.f32 %v1777, %v1896
        %v1915 = vadd.f32 %v1778, %v1898
        %1916 = vst [vmem:[#allocation2] sm:$0xff] %v1900
        %1917 = vst [vmem:[#allocation2 + $0x8] sm:$0xff] %v1901
        %1918 = vst [vmem:[#allocation2 + $0x10] sm:$0xff] %v1902
        %1919 = vst [vmem:[#allocation2 + $0x18] sm:$0xff] %v1903
        %1920 = vst [vmem:[#allocation2 + $0x20] sm:$0xff] %v1904
        %1921 = vst [vmem:[#allocation2 + $0x28] sm:$0xff] %v1905
        %1922 = vst [vmem:[#allocation2 + $0x30] sm:$0xff] %v1906
        %1923 = vst [vmem:[#allocation2 + $0x38] sm:$0xff] %v1907
        %1924 = vst [vmem:[#allocation2 + $0x40] sm:$0xff] %v1908
        %1925 = vst [vmem:[#allocation2 + $0x48] sm:$0xff] %v1909
        %1926 = vst [vmem:[#allocation2 + $0x50] sm:$0xff] %v1910
        %1927 = vst [vmem:[#allocation2 + $0x58] sm:$0xff] %v1911
        %1928 = vst [vmem:[#allocation2 + $0x60] sm:$0xff] %v1912
        %1929 = vst [vmem:[#allocation2 + $0x68] sm:$0xff] %v1913
        %1930 = vst [vmem:[#allocation2 + $0x70] sm:$0xff] %v1914
        %1931 = vst [vmem:[#allocation2 + $0x78] sm:$0xff] %v1915
        %v1932 = vld [vmem:[%s504] sm:$0xff]
        %v1933 = vld [vmem:[%s504 + $0x8] sm:$0xff]
        %v1934 = vld [vmem:[%s504 + $0x10] sm:$0xff]
        %v1935 = vld [vmem:[%s504 + $0x18] sm:$0xff]
        %v1936 = vld [vmem:[%s504 + $0x20] sm:$0xff]
        %v1937 = vld [vmem:[%s504 + $0x28] sm:$0xff]
        %v1938 = vld [vmem:[%s504 + $0x30] sm:$0xff]
        %v1939 = vld [vmem:[%s504 + $0x38] sm:$0xff]
        %v1940 = vld [vmem:[%s504 + $0x40] sm:$0xff]
        %v1941 = vld [vmem:[%s504 + $0x48] sm:$0xff]
        %v1942 = vld [vmem:[%s504 + $0x50] sm:$0xff]
        %v1943 = vld [vmem:[%s504 + $0x58] sm:$0xff]
        %v1944 = vld [vmem:[%s504 + $0x60] sm:$0xff]
        %v1945 = vld [vmem:[%s504 + $0x68] sm:$0xff]
        %v1946 = vld [vmem:[%s504 + $0x70] sm:$0xff]
        %v1947 = vld [vmem:[%s504 + $0x78] sm:$0xff]
        %v1948 = vld [vmem:[%s504 + $0x80] sm:$0xff]
        %v1949 = vld [vmem:[%s504 + $0x88] sm:$0xff]
        %v1950 = vld [vmem:[%s504 + $0x90] sm:$0xff]
        %v1951 = vld [vmem:[%s504 + $0x98] sm:$0xff]
        %v1952 = vld [vmem:[%s504 + $0xa0] sm:$0xff]
        %v1953 = vld [vmem:[%s504 + $0xa8] sm:$0xff]
        %v1954 = vld [vmem:[%s504 + $0xb0] sm:$0xff]
        %v1955 = vld [vmem:[%s504 + $0xb8] sm:$0xff]
        %v1956 = vld [vmem:[%s504 + $0xc0] sm:$0xff]
        %v1957 = vld [vmem:[%s504 + $0xc8] sm:$0xff]
        %v1958 = vld [vmem:[%s504 + $0xd0] sm:$0xff]
        %v1959 = vld [vmem:[%s504 + $0xd8] sm:$0xff]
        %v1960 = vld [vmem:[%s504 + $0xe0] sm:$0xff]
        %v1961 = vld [vmem:[%s504 + $0xe8] sm:$0xff]
        %v1962 = vld [vmem:[%s504 + $0xf0] sm:$0xff]
        %v1963 = vld [vmem:[%s504 + $0xf8] sm:$0xff]
        %1965 = vset.pattern.permute.xlu0 0
        %1966 = vperm.xlu0 %1965, %v1932
        %v1967 = vpop.permute.xlu0 %1966
        %1970 = vset.pattern.permute.xlu0 0
        %1971 = vperm.xlu0 %1970, %v1933
        %v1972 = vpop.permute.xlu0 %1971
        %1975 = vset.pattern.permute.xlu0 0
        %1976 = vperm.xlu0 %1975, %v1934
        %v1977 = vpop.permute.xlu0 %1976
        %1980 = vset.pattern.permute.xlu0 0
        %1981 = vperm.xlu0 %1980, %v1935
        %v1982 = vpop.permute.xlu0 %1981
        %1985 = vset.pattern.permute.xlu0 0
        %1986 = vperm.xlu0 %1985, %v1936
        %v1987 = vpop.permute.xlu0 %1986
        %1990 = vset.pattern.permute.xlu0 0
        %1991 = vperm.xlu0 %1990, %v1937
        %v1992 = vpop.permute.xlu0 %1991
        %1995 = vset.pattern.permute.xlu0 0
        %1996 = vperm.xlu0 %1995, %v1938
        %v1997 = vpop.permute.xlu0 %1996
        %2000 = vset.pattern.permute.xlu0 0
        %2001 = vperm.xlu0 %2000, %v1939
        %v2002 = vpop.permute.xlu0 %2001
        %2005 = vset.pattern.permute.xlu0 0
        %2006 = vperm.xlu0 %2005, %v1940
        %v2007 = vpop.permute.xlu0 %2006
        %2010 = vset.pattern.permute.xlu0 0
        %2011 = vperm.xlu0 %2010, %v1941
        %v2012 = vpop.permute.xlu0 %2011
        %2015 = vset.pattern.permute.xlu0 0
        %2016 = vperm.xlu0 %2015, %v1942
        %v2017 = vpop.permute.xlu0 %2016
        %2020 = vset.pattern.permute.xlu0 0
        %2021 = vperm.xlu0 %2020, %v1943
        %v2022 = vpop.permute.xlu0 %2021
        %2025 = vset.pattern.permute.xlu0 0
        %2026 = vperm.xlu0 %2025, %v1944
        %v2027 = vpop.permute.xlu0 %2026
        %2030 = vset.pattern.permute.xlu0 0
        %2031 = vperm.xlu0 %2030, %v1945
        %v2032 = vpop.permute.xlu0 %2031
        %2035 = vset.pattern.permute.xlu0 0
        %2036 = vperm.xlu0 %2035, %v1946
        %v2037 = vpop.permute.xlu0 %2036
        %2040 = vset.pattern.permute.xlu0 0
        %2041 = vperm.xlu0 %2040, %v1947
        %v2042 = vpop.permute.xlu0 %2041
        %2045 = vset.pattern.permute.xlu0 0
        %2046 = vperm.xlu0 %2045, %v1948
        %v2047 = vpop.permute.xlu0 %2046
        %2050 = vset.pattern.permute.xlu0 0
        %2051 = vperm.xlu0 %2050, %v1949
        %v2052 = vpop.permute.xlu0 %2051
        %2055 = vset.pattern.permute.xlu0 0
        %2056 = vperm.xlu0 %2055, %v1950
        %v2057 = vpop.permute.xlu0 %2056
        %2060 = vset.pattern.permute.xlu0 0
        %2061 = vperm.xlu0 %2060, %v1951
        %v2062 = vpop.permute.xlu0 %2061
        %2065 = vset.pattern.permute.xlu0 0
        %2066 = vperm.xlu0 %2065, %v1952
        %v2067 = vpop.permute.xlu0 %2066
        %2070 = vset.pattern.permute.xlu0 0
        %2071 = vperm.xlu0 %2070, %v1953
        %v2072 = vpop.permute.xlu0 %2071
        %2075 = vset.pattern.permute.xlu0 0
        %2076 = vperm.xlu0 %2075, %v1954
        %v2077 = vpop.permute.xlu0 %2076
        %2080 = vset.pattern.permute.xlu0 0
        %2081 = vperm.xlu0 %2080, %v1955
        %v2082 = vpop.permute.xlu0 %2081
        %2085 = vset.pattern.permute.xlu0 0
        %2086 = vperm.xlu0 %2085, %v1956
        %v2087 = vpop.permute.xlu0 %2086
        %2090 = vset.pattern.permute.xlu0 0
        %2091 = vperm.xlu0 %2090, %v1957
        %v2092 = vpop.permute.xlu0 %2091
        %2095 = vset.pattern.permute.xlu0 0
        %2096 = vperm.xlu0 %2095, %v1958
        %v2097 = vpop.permute.xlu0 %2096
        %2100 = vset.pattern.permute.xlu0 0
        %2101 = vperm.xlu0 %2100, %v1959
        %v2102 = vpop.permute.xlu0 %2101
        %2105 = vset.pattern.permute.xlu0 0
        %2106 = vperm.xlu0 %2105, %v1960
        %v2107 = vpop.permute.xlu0 %2106
        %2110 = vset.pattern.permute.xlu0 0
        %2111 = vperm.xlu0 %2110, %v1961
        %v2112 = vpop.permute.xlu0 %2111
        %2115 = vset.pattern.permute.xlu0 0
        %2116 = vperm.xlu0 %2115, %v1962
        %v2117 = vpop.permute.xlu0 %2116
        %2120 = vset.pattern.permute.xlu0 0
        %2121 = vperm.xlu0 %2120, %v1963
        %v2122 = vpop.permute.xlu0 %2121
        %v2124 = vmul.f32 %v1266, %v1967
        %v2125 = vmul.f32 %v1267, %v1972
        %v2126 = vmul.f32 %v1268, %v1977
        %v2127 = vmul.f32 %v1269, %v1982
        %v2128 = vmul.f32 %v1270, %v1987
        %v2129 = vmul.f32 %v1271, %v1992
        %v2130 = vmul.f32 %v1272, %v1997
        %v2131 = vmul.f32 %v1273, %v2002
        %v2132 = vmul.f32 %v1274, %v2007
        %v2133 = vmul.f32 %v1275, %v2012
        %v2134 = vmul.f32 %v1276, %v2017
        %v2135 = vmul.f32 %v1277, %v2022
        %v2136 = vmul.f32 %v1278, %v2027
        %v2137 = vmul.f32 %v1279, %v2032
        %v2138 = vmul.f32 %v1280, %v2037
        %v2139 = vmul.f32 %v1281, %v2042
        %v2140 = vmul.f32 %v1282, %v2047
        %v2141 = vmul.f32 %v1283, %v2052
        %v2142 = vmul.f32 %v1284, %v2057
        %v2143 = vmul.f32 %v1285, %v2062
        %v2144 = vmul.f32 %v1286, %v2067
        %v2145 = vmul.f32 %v1287, %v2072
        %v2146 = vmul.f32 %v1288, %v2077
        %v2147 = vmul.f32 %v1289, %v2082
        %v2148 = vmul.f32 %v1290, %v2087
        %v2149 = vmul.f32 %v1291, %v2092
        %v2150 = vmul.f32 %v1292, %v2097
        %v2151 = vmul.f32 %v1293, %v2102
        %v2152 = vmul.f32 %v1294, %v2107
        %v2153 = vmul.f32 %v1295, %v2112
        %v2154 = vmul.f32 %v1296, %v2117
        %v2155 = vmul.f32 %v1297, %v2122
        %v2156 = vld [vmem:[%s10] sm:$0x1]
        %v2157 = vld [vmem:[%s11] sm:$0x1]
        %2158 = vadd.xlane.f32.xlu0 %v2124
        %v2159 = vpop.xlane.xlu0 %2158
        %2160 = vadd.xlane.f32.xlu0 %v2125
        %v2161 = vpop.xlane.xlu0 %2160
        %2162 = vadd.xlane.f32.xlu0 %v2126
        %v2163 = vpop.xlane.xlu0 %2162
        %2164 = vadd.xlane.f32.xlu0 %v2127
        %v2165 = vpop.xlane.xlu0 %2164
        %2166 = vadd.xlane.f32.xlu0 %v2128
        %v2167 = vpop.xlane.xlu0 %2166
        %2168 = vadd.xlane.f32.xlu0 %v2129
        %v2169 = vpop.xlane.xlu0 %2168
        %2170 = vadd.xlane.f32.xlu0 %v2130
        %v2171 = vpop.xlane.xlu0 %2170
        %2172 = vadd.xlane.f32.xlu0 %v2131
        %v2173 = vpop.xlane.xlu0 %2172
        %2174 = vadd.xlane.f32.xlu0 %v2132
        %v2175 = vpop.xlane.xlu0 %2174
        %2176 = vadd.xlane.f32.xlu0 %v2133
        %v2177 = vpop.xlane.xlu0 %2176
        %2178 = vadd.xlane.f32.xlu0 %v2134
        %v2179 = vpop.xlane.xlu0 %2178
        %2180 = vadd.xlane.f32.xlu0 %v2135
        %v2181 = vpop.xlane.xlu0 %2180
        %2182 = vadd.xlane.f32.xlu0 %v2136
        %v2183 = vpop.xlane.xlu0 %2182
        %2184 = vadd.xlane.f32.xlu0 %v2137
        %v2185 = vpop.xlane.xlu0 %2184
        %2186 = vadd.xlane.f32.xlu0 %v2138
        %v2187 = vpop.xlane.xlu0 %2186
        %2188 = vadd.xlane.f32.xlu0 %v2139
        %v2189 = vpop.xlane.xlu0 %2188
        %2190 = vadd.xlane.f32.xlu0 %v2140
        %v2191 = vpop.xlane.xlu0 %2190
        %2192 = vadd.xlane.f32.xlu0 %v2141
        %v2193 = vpop.xlane.xlu0 %2192
        %2194 = vadd.xlane.f32.xlu0 %v2142
        %v2195 = vpop.xlane.xlu0 %2194
        %2196 = vadd.xlane.f32.xlu0 %v2143
        %v2197 = vpop.xlane.xlu0 %2196
        %2198 = vadd.xlane.f32.xlu0 %v2144
        %v2199 = vpop.xlane.xlu0 %2198
        %2200 = vadd.xlane.f32.xlu0 %v2145
        %v2201 = vpop.xlane.xlu0 %2200
        %2202 = vadd.xlane.f32.xlu0 %v2146
        %v2203 = vpop.xlane.xlu0 %2202
        %2204 = vadd.xlane.f32.xlu0 %v2147
        %v2205 = vpop.xlane.xlu0 %2204
        %2206 = vadd.xlane.f32.xlu0 %v2148
        %v2207 = vpop.xlane.xlu0 %2206
        %2208 = vadd.xlane.f32.xlu0 %v2149
        %v2209 = vpop.xlane.xlu0 %2208
        %2210 = vadd.xlane.f32.xlu0 %v2150
        %v2211 = vpop.xlane.xlu0 %2210
        %2212 = vadd.xlane.f32.xlu0 %v2151
        %v2213 = vpop.xlane.xlu0 %2212
        %2214 = vadd.xlane.f32.xlu0 %v2152
        %v2215 = vpop.xlane.xlu0 %2214
        %2216 = vadd.xlane.f32.xlu0 %v2153
        %v2217 = vpop.xlane.xlu0 %2216
        %2218 = vadd.xlane.f32.xlu0 %v2154
        %v2219 = vpop.xlane.xlu0 %2218
        %2220 = vadd.xlane.f32.xlu0 %v2155
        %v2221 = vpop.xlane.xlu0 %2220
        %v2222 = vrcp.pop 128.0
        %v2223 = vmul.f32 %v2159, %v2222
        %v2224 = vmul.f32 %v2161, %v2222
        %v2225 = vmul.f32 %v2163, %v2222
        %v2226 = vmul.f32 %v2165, %v2222
        %v2227 = vmul.f32 %v2167, %v2222
        %v2228 = vmul.f32 %v2169, %v2222
        %v2229 = vmul.f32 %v2171, %v2222
        %v2230 = vmul.f32 %v2173, %v2222
        %v2231 = vmul.f32 %v2175, %v2222
        %v2232 = vmul.f32 %v2177, %v2222
        %v2233 = vmul.f32 %v2179, %v2222
        %v2234 = vmul.f32 %v2181, %v2222
        %v2235 = vmul.f32 %v2183, %v2222
        %v2236 = vmul.f32 %v2185, %v2222
        %v2237 = vmul.f32 %v2187, %v2222
        %v2238 = vmul.f32 %v2189, %v2222
        %v2239 = vmul.f32 %v2191, %v2222
        %v2240 = vmul.f32 %v2193, %v2222
        %v2241 = vmul.f32 %v2195, %v2222
        %v2242 = vmul.f32 %v2197, %v2222
        %v2243 = vmul.f32 %v2199, %v2222
        %v2244 = vmul.f32 %v2201, %v2222
        %v2245 = vmul.f32 %v2203, %v2222
        %v2246 = vmul.f32 %v2205, %v2222
        %v2247 = vmul.f32 %v2207, %v2222
        %v2248 = vmul.f32 %v2209, %v2222
        %v2249 = vmul.f32 %v2211, %v2222
        %v2250 = vmul.f32 %v2213, %v2222
        %v2251 = vmul.f32 %v2215, %v2222
        %v2252 = vmul.f32 %v2217, %v2222
        %v2253 = vmul.f32 %v2219, %v2222
        %v2254 = vmul.f32 %v2221, %v2222
        %v2255 = vsub.f32 %v2124, %v2223
        %v2256 = vsub.f32 %v2125, %v2224
        %v2257 = vsub.f32 %v2126, %v2225
        %v2258 = vsub.f32 %v2127, %v2226
        %v2259 = vsub.f32 %v2128, %v2227
        %v2260 = vsub.f32 %v2129, %v2228
        %v2261 = vsub.f32 %v2130, %v2229
        %v2262 = vsub.f32 %v2131, %v2230
        %v2263 = vsub.f32 %v2132, %v2231
        %v2264 = vsub.f32 %v2133, %v2232
        %v2265 = vsub.f32 %v2134, %v2233
        %v2266 = vsub.f32 %v2135, %v2234
        %v2267 = vsub.f32 %v2136, %v2235
        %v2268 = vsub.f32 %v2137, %v2236
        %v2269 = vsub.f32 %v2138, %v2237
        %v2270 = vsub.f32 %v2139, %v2238
        %v2271 = vsub.f32 %v2140, %v2239
        %v2272 = vsub.f32 %v2141, %v2240
        %v2273 = vsub.f32 %v2142, %v2241
        %v2274 = vsub.f32 %v2143, %v2242
        %v2275 = vsub.f32 %v2144, %v2243
        %v2276 = vsub.f32 %v2145, %v2244
        %v2277 = vsub.f32 %v2146, %v2245
        %v2278 = vsub.f32 %v2147, %v2246
        %v2279 = vsub.f32 %v2148, %v2247
        %v2280 = vsub.f32 %v2149, %v2248
        %v2281 = vsub.f32 %v2150, %v2249
        %v2282 = vsub.f32 %v2151, %v2250
        %v2283 = vsub.f32 %v2152, %v2251
        %v2284 = vsub.f32 %v2153, %v2252
        %v2285 = vsub.f32 %v2154, %v2253
        %v2286 = vsub.f32 %v2155, %v2254
        %v2287 = vmul.f32 %v2255, %v2255
        %v2288 = vmul.f32 %v2256, %v2256
        %v2289 = vmul.f32 %v2257, %v2257
        %v2290 = vmul.f32 %v2258, %v2258
        %v2291 = vmul.f32 %v2259, %v2259
        %v2292 = vmul.f32 %v2260, %v2260
        %v2293 = vmul.f32 %v2261, %v2261
        %v2294 = vmul.f32 %v2262, %v2262
        %v2295 = vmul.f32 %v2263, %v2263
        %v2296 = vmul.f32 %v2264, %v2264
        %v2297 = vmul.f32 %v2265, %v2265
        %v2298 = vmul.f32 %v2266, %v2266
        %v2299 = vmul.f32 %v2267, %v2267
        %v2300 = vmul.f32 %v2268, %v2268
        %v2301 = vmul.f32 %v2269, %v2269
        %v2302 = vmul.f32 %v2270, %v2270
        %v2303 = vmul.f32 %v2271, %v2271
        %v2304 = vmul.f32 %v2272, %v2272
        %v2305 = vmul.f32 %v2273, %v2273
        %v2306 = vmul.f32 %v2274, %v2274
        %v2307 = vmul.f32 %v2275, %v2275
        %v2308 = vmul.f32 %v2276, %v2276
        %v2309 = vmul.f32 %v2277, %v2277
        %v2310 = vmul.f32 %v2278, %v2278
        %v2311 = vmul.f32 %v2279, %v2279
        %v2312 = vmul.f32 %v2280, %v2280
        %v2313 = vmul.f32 %v2281, %v2281
        %v2314 = vmul.f32 %v2282, %v2282
        %v2315 = vmul.f32 %v2283, %v2283
        %v2316 = vmul.f32 %v2284, %v2284
        %v2317 = vmul.f32 %v2285, %v2285
        %v2318 = vmul.f32 %v2286, %v2286
        %2319 = vadd.xlane.f32.xlu0 %v2287
        %v2320 = vpop.xlane.xlu0 %2319
        %2321 = vadd.xlane.f32.xlu0 %v2288
        %v2322 = vpop.xlane.xlu0 %2321
        %2323 = vadd.xlane.f32.xlu0 %v2289
        %v2324 = vpop.xlane.xlu0 %2323
        %2325 = vadd.xlane.f32.xlu0 %v2290
        %v2326 = vpop.xlane.xlu0 %2325
        %2327 = vadd.xlane.f32.xlu0 %v2291
        %v2328 = vpop.xlane.xlu0 %2327
        %2329 = vadd.xlane.f32.xlu0 %v2292
        %v2330 = vpop.xlane.xlu0 %2329
        %2331 = vadd.xlane.f32.xlu0 %v2293
        %v2332 = vpop.xlane.xlu0 %2331
        %2333 = vadd.xlane.f32.xlu0 %v2294
        %v2334 = vpop.xlane.xlu0 %2333
        %2335 = vadd.xlane.f32.xlu0 %v2295
        %v2336 = vpop.xlane.xlu0 %2335
        %2337 = vadd.xlane.f32.xlu0 %v2296
        %v2338 = vpop.xlane.xlu0 %2337
        %2339 = vadd.xlane.f32.xlu0 %v2297
        %v2340 = vpop.xlane.xlu0 %2339
        %2341 = vadd.xlane.f32.xlu0 %v2298
        %v2342 = vpop.xlane.xlu0 %2341
        %2343 = vadd.xlane.f32.xlu0 %v2299
        %v2344 = vpop.xlane.xlu0 %2343
        %2345 = vadd.xlane.f32.xlu0 %v2300
        %v2346 = vpop.xlane.xlu0 %2345
        %2347 = vadd.xlane.f32.xlu0 %v2301
        %v2348 = vpop.xlane.xlu0 %2347
        %2349 = vadd.xlane.f32.xlu0 %v2302
        %v2350 = vpop.xlane.xlu0 %2349
        %2351 = vadd.xlane.f32.xlu0 %v2303
        %v2352 = vpop.xlane.xlu0 %2351
        %2353 = vadd.xlane.f32.xlu0 %v2304
        %v2354 = vpop.xlane.xlu0 %2353
        %2355 = vadd.xlane.f32.xlu0 %v2305
        %v2356 = vpop.xlane.xlu0 %2355
        %2357 = vadd.xlane.f32.xlu0 %v2306
        %v2358 = vpop.xlane.xlu0 %2357
        %2359 = vadd.xlane.f32.xlu0 %v2307
        %v2360 = vpop.xlane.xlu0 %2359
        %2361 = vadd.xlane.f32.xlu0 %v2308
        %v2362 = vpop.xlane.xlu0 %2361
        %2363 = vadd.xlane.f32.xlu0 %v2309
        %v2364 = vpop.xlane.xlu0 %2363
        %2365 = vadd.xlane.f32.xlu0 %v2310
        %v2366 = vpop.xlane.xlu0 %2365
        %2367 = vadd.xlane.f32.xlu0 %v2311
        %v2368 = vpop.xlane.xlu0 %2367
        %2369 = vadd.xlane.f32.xlu0 %v2312
        %v2370 = vpop.xlane.xlu0 %2369
        %2371 = vadd.xlane.f32.xlu0 %v2313
        %v2372 = vpop.xlane.xlu0 %2371
        %2373 = vadd.xlane.f32.xlu0 %v2314
        %v2374 = vpop.xlane.xlu0 %2373
        %2375 = vadd.xlane.f32.xlu0 %v2315
        %v2376 = vpop.xlane.xlu0 %2375
        %2377 = vadd.xlane.f32.xlu0 %v2316
        %v2378 = vpop.xlane.xlu0 %2377
        %2379 = vadd.xlane.f32.xlu0 %v2317
        %v2380 = vpop.xlane.xlu0 %2379
        %2381 = vadd.xlane.f32.xlu0 %v2318
        %v2382 = vpop.xlane.xlu0 %2381
        %v2383 = vmul.f32 %v2320, %v2222
        %v2384 = vmul.f32 %v2322, %v2222
        %v2385 = vmul.f32 %v2324, %v2222
        %v2386 = vmul.f32 %v2326, %v2222
        %v2387 = vmul.f32 %v2328, %v2222
        %v2388 = vmul.f32 %v2330, %v2222
        %v2389 = vmul.f32 %v2332, %v2222
        %v2390 = vmul.f32 %v2334, %v2222
        %v2391 = vmul.f32 %v2336, %v2222
        %v2392 = vmul.f32 %v2338, %v2222
        %v2393 = vmul.f32 %v2340, %v2222
        %v2394 = vmul.f32 %v2342, %v2222
        %v2395 = vmul.f32 %v2344, %v2222
        %v2396 = vmul.f32 %v2346, %v2222
        %v2397 = vmul.f32 %v2348, %v2222
        %v2398 = vmul.f32 %v2350, %v2222
        %v2399 = vmul.f32 %v2352, %v2222
        %v2400 = vmul.f32 %v2354, %v2222
        %v2401 = vmul.f32 %v2356, %v2222
        %v2402 = vmul.f32 %v2358, %v2222
        %v2403 = vmul.f32 %v2360, %v2222
        %v2404 = vmul.f32 %v2362, %v2222
        %v2405 = vmul.f32 %v2364, %v2222
        %v2406 = vmul.f32 %v2366, %v2222
        %v2407 = vmul.f32 %v2368, %v2222
        %v2408 = vmul.f32 %v2370, %v2222
        %v2409 = vmul.f32 %v2372, %v2222
        %v2410 = vmul.f32 %v2374, %v2222
        %v2411 = vmul.f32 %v2376, %v2222
        %v2412 = vmul.f32 %v2378, %v2222
        %v2413 = vmul.f32 %v2380, %v2222
        %v2414 = vmul.f32 %v2382, %v2222
        %v2415 = vadd.f32 %v2383, 1e-05
        %v2416 = vadd.f32 %v2384, 1e-05
        %v2417 = vadd.f32 %v2385, 1e-05
        %v2418 = vadd.f32 %v2386, 1e-05
        %v2419 = vadd.f32 %v2387, 1e-05
        %v2420 = vadd.f32 %v2388, 1e-05
        %v2421 = vadd.f32 %v2389, 1e-05
        %v2422 = vadd.f32 %v2390, 1e-05
        %v2423 = vadd.f32 %v2391, 1e-05
        %v2424 = vadd.f32 %v2392, 1e-05
        %v2425 = vadd.f32 %v2393, 1e-05
        %v2426 = vadd.f32 %v2394, 1e-05
        %v2427 = vadd.f32 %v2395, 1e-05
        %v2428 = vadd.f32 %v2396, 1e-05
        %v2429 = vadd.f32 %v2397, 1e-05
        %v2430 = vadd.f32 %v2398, 1e-05
        %v2431 = vadd.f32 %v2399, 1e-05
        %v2432 = vadd.f32 %v2400, 1e-05
        %v2433 = vadd.f32 %v2401, 1e-05
        %v2434 = vadd.f32 %v2402, 1e-05
        %v2435 = vadd.f32 %v2403, 1e-05
        %v2436 = vadd.f32 %v2404, 1e-05
        %v2437 = vadd.f32 %v2405, 1e-05
        %v2438 = vadd.f32 %v2406, 1e-05
        %v2439 = vadd.f32 %v2407, 1e-05
        %v2440 = vadd.f32 %v2408, 1e-05
        %v2441 = vadd.f32 %v2409, 1e-05
        %v2442 = vadd.f32 %v2410, 1e-05
        %v2443 = vadd.f32 %v2411, 1e-05
        %v2444 = vadd.f32 %v2412, 1e-05
        %v2445 = vadd.f32 %v2413, 1e-05
        %v2446 = vadd.f32 %v2414, 1e-05
        %v2447 = vrsqrt.pop %v2415
        %v2448 = vrsqrt.pop %v2416
        %v2449 = vrsqrt.pop %v2417
        %v2450 = vrsqrt.pop %v2418
        %v2451 = vrsqrt.pop %v2419
        %v2452 = vrsqrt.pop %v2420
        %v2453 = vrsqrt.pop %v2421
        %v2454 = vrsqrt.pop %v2422
        %v2455 = vrsqrt.pop %v2423
        %v2456 = vrsqrt.pop %v2424
        %v2457 = vrsqrt.pop %v2425
        %v2458 = vrsqrt.pop %v2426
        %v2459 = vrsqrt.pop %v2427
        %v2460 = vrsqrt.pop %v2428
        %v2461 = vrsqrt.pop %v2429
        %v2462 = vrsqrt.pop %v2430
        %v2463 = vrsqrt.pop %v2431
        %v2464 = vrsqrt.pop %v2432
        %v2465 = vrsqrt.pop %v2433
        %v2466 = vrsqrt.pop %v2434
        %v2467 = vrsqrt.pop %v2435
        %v2468 = vrsqrt.pop %v2436
        %v2469 = vrsqrt.pop %v2437
        %v2470 = vrsqrt.pop %v2438
        %v2471 = vrsqrt.pop %v2439
        %v2472 = vrsqrt.pop %v2440
        %v2473 = vrsqrt.pop %v2441
        %v2474 = vrsqrt.pop %v2442
        %v2475 = vrsqrt.pop %v2443
        %v2476 = vrsqrt.pop %v2444
        %v2477 = vrsqrt.pop %v2445
        %v2478 = vrsqrt.pop %v2446
        %v2479 = vmul.f32 %v2255, %v2447
        %v2480 = vmul.f32 %v2256, %v2448
        %v2481 = vmul.f32 %v2257, %v2449
        %v2482 = vmul.f32 %v2258, %v2450
        %v2483 = vmul.f32 %v2259, %v2451
        %v2484 = vmul.f32 %v2260, %v2452
        %v2485 = vmul.f32 %v2261, %v2453
        %v2486 = vmul.f32 %v2262, %v2454
        %v2487 = vmul.f32 %v2263, %v2455
        %v2488 = vmul.f32 %v2264, %v2456
        %v2489 = vmul.f32 %v2265, %v2457
        %v2490 = vmul.f32 %v2266, %v2458
        %v2491 = vmul.f32 %v2267, %v2459
        %v2492 = vmul.f32 %v2268, %v2460
        %v2493 = vmul.f32 %v2269, %v2461
        %v2494 = vmul.f32 %v2270, %v2462
        %v2495 = vmul.f32 %v2271, %v2463
        %v2496 = vmul.f32 %v2272, %v2464
        %v2497 = vmul.f32 %v2273, %v2465
        %v2498 = vmul.f32 %v2274, %v2466
        %v2499 = vmul.f32 %v2275, %v2467
        %v2500 = vmul.f32 %v2276, %v2468
        %v2501 = vmul.f32 %v2277, %v2469
        %v2502 = vmul.f32 %v2278, %v2470
        %v2503 = vmul.f32 %v2279, %v2471
        %v2504 = vmul.f32 %v2280, %v2472
        %v2505 = vmul.f32 %v2281, %v2473
        %v2506 = vmul.f32 %v2282, %v2474
        %v2507 = vmul.f32 %v2283, %v2475
        %v2508 = vmul.f32 %v2284, %v2476
        %v2509 = vmul.f32 %v2285, %v2477
        %v2510 = vmul.f32 %v2286, %v2478
        %v2512 = vlaneseq
        %v2513 = vshrl.u32 %v2512, 7
        %v2514 = vsub.s32 0, %v2513
        %v2515 = vrot.slane %v2156, %v2514
        %v2517 = vmul.f32 %v2479, %v2515
        %v2518 = vmul.f32 %v2480, %v2515
        %v2519 = vmul.f32 %v2481, %v2515
        %v2520 = vmul.f32 %v2482, %v2515
        %v2521 = vmul.f32 %v2483, %v2515
        %v2522 = vmul.f32 %v2484, %v2515
        %v2523 = vmul.f32 %v2485, %v2515
        %v2524 = vmul.f32 %v2486, %v2515
        %v2525 = vmul.f32 %v2487, %v2515
        %v2526 = vmul.f32 %v2488, %v2515
        %v2527 = vmul.f32 %v2489, %v2515
        %v2528 = vmul.f32 %v2490, %v2515
        %v2529 = vmul.f32 %v2491, %v2515
        %v2530 = vmul.f32 %v2492, %v2515
        %v2531 = vmul.f32 %v2493, %v2515
        %v2532 = vmul.f32 %v2494, %v2515
        %v2533 = vmul.f32 %v2495, %v2515
        %v2534 = vmul.f32 %v2496, %v2515
        %v2535 = vmul.f32 %v2497, %v2515
        %v2536 = vmul.f32 %v2498, %v2515
        %v2537 = vmul.f32 %v2499, %v2515
        %v2538 = vmul.f32 %v2500, %v2515
        %v2539 = vmul.f32 %v2501, %v2515
        %v2540 = vmul.f32 %v2502, %v2515
        %v2541 = vmul.f32 %v2503, %v2515
        %v2542 = vmul.f32 %v2504, %v2515
        %v2543 = vmul.f32 %v2505, %v2515
        %v2544 = vmul.f32 %v2506, %v2515
        %v2545 = vmul.f32 %v2507, %v2515
        %v2546 = vmul.f32 %v2508, %v2515
        %v2547 = vmul.f32 %v2509, %v2515
        %v2548 = vmul.f32 %v2510, %v2515
        %v2550 = vlaneseq
        %v2551 = vshrl.u32 %v2550, 7
        %v2552 = vsub.s32 0, %v2551
        %v2553 = vrot.slane %v2157, %v2552
        %v2555 = vadd.f32 %v2517, %v2553
        %v2556 = vadd.f32 %v2518, %v2553
        %v2557 = vadd.f32 %v2519, %v2553
        %v2558 = vadd.f32 %v2520, %v2553
        %v2559 = vadd.f32 %v2521, %v2553
        %v2560 = vadd.f32 %v2522, %v2553
        %v2561 = vadd.f32 %v2523, %v2553
        %v2562 = vadd.f32 %v2524, %v2553
        %v2563 = vadd.f32 %v2525, %v2553
        %v2564 = vadd.f32 %v2526, %v2553
        %v2565 = vadd.f32 %v2527, %v2553
        %v2566 = vadd.f32 %v2528, %v2553
        %v2567 = vadd.f32 %v2529, %v2553
        %v2568 = vadd.f32 %v2530, %v2553
        %v2569 = vadd.f32 %v2531, %v2553
        %v2570 = vadd.f32 %v2532, %v2553
        %v2571 = vadd.f32 %v2533, %v2553
        %v2572 = vadd.f32 %v2534, %v2553
        %v2573 = vadd.f32 %v2535, %v2553
        %v2574 = vadd.f32 %v2536, %v2553
        %v2575 = vadd.f32 %v2537, %v2553
        %v2576 = vadd.f32 %v2538, %v2553
        %v2577 = vadd.f32 %v2539, %v2553
        %v2578 = vadd.f32 %v2540, %v2553
        %v2579 = vadd.f32 %v2541, %v2553
        %v2580 = vadd.f32 %v2542, %v2553
        %v2581 = vadd.f32 %v2543, %v2553
        %v2582 = vadd.f32 %v2544, %v2553
        %v2583 = vadd.f32 %v2545, %v2553
        %v2584 = vadd.f32 %v2546, %v2553
        %v2585 = vadd.f32 %v2547, %v2553
        %v2586 = vadd.f32 %v2548, %v2553
        %v2587 = vmax.f32 %v2555, 0.0
        %v2588 = vmax.f32 %v2556, 0.0
        %v2589 = vmax.f32 %v2557, 0.0
        %v2590 = vmax.f32 %v2558, 0.0
        %v2591 = vmax.f32 %v2559, 0.0
        %v2592 = vmax.f32 %v2560, 0.0
        %v2593 = vmax.f32 %v2561, 0.0
        %v2594 = vmax.f32 %v2562, 0.0
        %v2595 = vmax.f32 %v2563, 0.0
        %v2596 = vmax.f32 %v2564, 0.0
        %v2597 = vmax.f32 %v2565, 0.0
        %v2598 = vmax.f32 %v2566, 0.0
        %v2599 = vmax.f32 %v2567, 0.0
        %v2600 = vmax.f32 %v2568, 0.0
        %v2601 = vmax.f32 %v2569, 0.0
        %v2602 = vmax.f32 %v2570, 0.0
        %v2603 = vmax.f32 %v2571, 0.0
        %v2604 = vmax.f32 %v2572, 0.0
        %v2605 = vmax.f32 %v2573, 0.0
        %v2606 = vmax.f32 %v2574, 0.0
        %v2607 = vmax.f32 %v2575, 0.0
        %v2608 = vmax.f32 %v2576, 0.0
        %v2609 = vmax.f32 %v2577, 0.0
        %v2610 = vmax.f32 %v2578, 0.0
        %v2611 = vmax.f32 %v2579, 0.0
        %v2612 = vmax.f32 %v2580, 0.0
        %v2613 = vmax.f32 %v2581, 0.0
        %v2614 = vmax.f32 %v2582, 0.0
        %v2615 = vmax.f32 %v2583, 0.0
        %v2616 = vmax.f32 %v2584, 0.0
        %v2617 = vmax.f32 %v2585, 0.0
        %v2618 = vmax.f32 %v2586, 0.0
        %v2619 = vpack.c.bf16 %v2588, %v2587
        %v2620 = vpack.c.bf16 %v2590, %v2589
        %v2621 = vpack.c.bf16 %v2592, %v2591
        %v2622 = vpack.c.bf16 %v2594, %v2593
        %v2623 = vpack.c.bf16 %v2596, %v2595
        %v2624 = vpack.c.bf16 %v2598, %v2597
        %v2625 = vpack.c.bf16 %v2600, %v2599
        %v2626 = vpack.c.bf16 %v2602, %v2601
        %v2627 = vpack.c.bf16 %v2604, %v2603
        %v2628 = vpack.c.bf16 %v2606, %v2605
        %v2629 = vpack.c.bf16 %v2608, %v2607
        %v2630 = vpack.c.bf16 %v2610, %v2609
        %v2631 = vpack.c.bf16 %v2612, %v2611
        %v2632 = vpack.c.bf16 %v2614, %v2613
        %v2633 = vpack.c.bf16 %v2616, %v2615
        %v2634 = vpack.c.bf16 %v2618, %v2617
        %v2651 = vunpack.c.l.b16 %v2619
        %v2652 = vunpack.c.h.b16 %v2619
        %v2653 = vunpack.c.l.b16 %v2620
        %v2654 = vunpack.c.h.b16 %v2620
        %v2655 = vunpack.c.l.b16 %v2621
        %v2656 = vunpack.c.h.b16 %v2621
        %v2657 = vunpack.c.l.b16 %v2622
        %v2658 = vunpack.c.h.b16 %v2622
        %v2659 = vunpack.c.l.b16 %v2623
        %v2660 = vunpack.c.h.b16 %v2623
        %v2661 = vunpack.c.l.b16 %v2624
        %v2662 = vunpack.c.h.b16 %v2624
        %v2663 = vunpack.c.l.b16 %v2625
        %v2664 = vunpack.c.h.b16 %v2625
        %v2665 = vunpack.c.l.b16 %v2626
        %v2666 = vunpack.c.h.b16 %v2626
        %v2667 = vunpack.c.l.b16 %v2627
        %v2668 = vunpack.c.h.b16 %v2627
        %v2669 = vunpack.c.l.b16 %v2628
        %v2670 = vunpack.c.h.b16 %v2628
        %v2671 = vunpack.c.l.b16 %v2629
        %v2672 = vunpack.c.h.b16 %v2629
        %v2673 = vunpack.c.l.b16 %v2630
        %v2674 = vunpack.c.h.b16 %v2630
        %v2675 = vunpack.c.l.b16 %v2631
        %v2676 = vunpack.c.h.b16 %v2631
        %v2677 = vunpack.c.l.b16 %v2632
        %v2678 = vunpack.c.h.b16 %v2632
        %v2679 = vunpack.c.l.b16 %v2633
        %v2680 = vunpack.c.h.b16 %v2633
        %v2681 = vunpack.c.l.b16 %v2634
        %v2682 = vunpack.c.h.b16 %v2634
        %v2683 = vpack.c.b16 %v2651, %v2651
        %v2684 = vpack.c.b16 %v2652, %v2652
        %v2685 = vpack.c.b16 %v2653, %v2653
        %v2686 = vpack.c.b16 %v2654, %v2654
        %v2687 = vpack.c.b16 %v2655, %v2655
        %v2688 = vpack.c.b16 %v2656, %v2656
        %v2689 = vpack.c.b16 %v2657, %v2657
        %v2690 = vpack.c.b16 %v2658, %v2658
        %v2691 = vpack.c.b16 %v2659, %v2659
        %v2692 = vpack.c.b16 %v2660, %v2660
        %v2693 = vpack.c.b16 %v2661, %v2661
        %v2694 = vpack.c.b16 %v2662, %v2662
        %v2695 = vpack.c.b16 %v2663, %v2663
        %v2696 = vpack.c.b16 %v2664, %v2664
        %v2697 = vpack.c.b16 %v2665, %v2665
        %v2698 = vpack.c.b16 %v2666, %v2666
        %v2699 = vpack.c.b16 %v2667, %v2667
        %v2700 = vpack.c.b16 %v2668, %v2668
        %v2701 = vpack.c.b16 %v2669, %v2669
        %v2702 = vpack.c.b16 %v2670, %v2670
        %v2703 = vpack.c.b16 %v2671, %v2671
        %v2704 = vpack.c.b16 %v2672, %v2672
        %v2705 = vpack.c.b16 %v2673, %v2673
        %v2706 = vpack.c.b16 %v2674, %v2674
        %v2707 = vpack.c.b16 %v2675, %v2675
        %v2708 = vpack.c.b16 %v2676, %v2676
        %v2709 = vpack.c.b16 %v2677, %v2677
        %v2710 = vpack.c.b16 %v2678, %v2678
        %v2711 = vpack.c.b16 %v2679, %v2679
        %v2712 = vpack.c.b16 %v2680, %v2680
        %v2713 = vpack.c.b16 %v2681, %v2681
        %v2714 = vpack.c.b16 %v2682, %v2682
        %2747 = vst [vmem:[%s481] sm:$0xf] %v2683
        %2748 = vst [vmem:[%s481 + $0x4] sm:$0xf] %v2684
        %2749 = vst [vmem:[%s481 + $0x8] sm:$0xf] %v2685
        %2750 = vst [vmem:[%s481 + $0xc] sm:$0xf] %v2686
        %2751 = vst [vmem:[%s481 + $0x10] sm:$0xf] %v2687
        %2752 = vst [vmem:[%s481 + $0x14] sm:$0xf] %v2688
        %2753 = vst [vmem:[%s481 + $0x18] sm:$0xf] %v2689
        %2754 = vst [vmem:[%s481 + $0x1c] sm:$0xf] %v2690
        %2755 = vst [vmem:[%s481 + $0x20] sm:$0xf] %v2691
        %2756 = vst [vmem:[%s481 + $0x24] sm:$0xf] %v2692
        %2757 = vst [vmem:[%s481 + $0x28] sm:$0xf] %v2693
        %2758 = vst [vmem:[%s481 + $0x2c] sm:$0xf] %v2694
        %2759 = vst [vmem:[%s481 + $0x30] sm:$0xf] %v2695
        %2760 = vst [vmem:[%s481 + $0x34] sm:$0xf] %v2696
        %2761 = vst [vmem:[%s481 + $0x38] sm:$0xf] %v2697
        %2762 = vst [vmem:[%s481 + $0x3c] sm:$0xf] %v2698
        %2763 = vst [vmem:[%s481 + $0x40] sm:$0xf] %v2699
        %2764 = vst [vmem:[%s481 + $0x44] sm:$0xf] %v2700
        %2765 = vst [vmem:[%s481 + $0x48] sm:$0xf] %v2701
        %2766 = vst [vmem:[%s481 + $0x4c] sm:$0xf] %v2702
        %2767 = vst [vmem:[%s481 + $0x50] sm:$0xf] %v2703
        %2768 = vst [vmem:[%s481 + $0x54] sm:$0xf] %v2704
        %2769 = vst [vmem:[%s481 + $0x58] sm:$0xf] %v2705
        %2770 = vst [vmem:[%s481 + $0x5c] sm:$0xf] %v2706
        %2771 = vst [vmem:[%s481 + $0x60] sm:$0xf] %v2707
        %2772 = vst [vmem:[%s481 + $0x64] sm:$0xf] %v2708
        %2773 = vst [vmem:[%s481 + $0x68] sm:$0xf] %v2709
        %2774 = vst [vmem:[%s481 + $0x6c] sm:$0xf] %v2710
        %2775 = vst [vmem:[%s481 + $0x70] sm:$0xf] %v2711
        %2776 = vst [vmem:[%s481 + $0x74] sm:$0xf] %v2712
        %2777 = vst [vmem:[%s481 + $0x78] sm:$0xf] %v2713
        %2778 = vst [vmem:[%s481 + $0x7c] sm:$0xf] %v2714
        %p2779 = scmp.eq.s32.totalorder %s29, 1
        // Predicated region
        $region73: #{gated_gcn_forward.1} parent=67 // pred_check
          %p2780 = pneg %p2779
        $region74: #{gated_gcn_forward.1} parent=67 // pred_check_branch
          %2782 = sbr.rel (%p2780) target = $region76
        $region75: #{gated_gcn_forward.1} parent=67 // pred_region
          %v2783 = vld [vmem:[#allocation2] sm:$0xff]
          %v2784 = vld [vmem:[#allocation2 + $0x10] sm:$0xff]
          %v2785 = vld [vmem:[#allocation2 + $0x20] sm:$0xff]
          %v2786 = vld [vmem:[#allocation2 + $0x30] sm:$0xff]
          %v2787 = vld [vmem:[#allocation2 + $0x40] sm:$0xff]
          %v2788 = vld [vmem:[#allocation2 + $0x50] sm:$0xff]
          %v2789 = vld [vmem:[#allocation2 + $0x60] sm:$0xff]
          %v2790 = vld [vmem:[#allocation2 + $0x70] sm:$0xff]
          %v2791 = vld [vmem:[#allocation2 + $0x8] sm:$0xff]
          %v2792 = vld [vmem:[#allocation2 + $0x18] sm:$0xff]
          %v2793 = vld [vmem:[#allocation2 + $0x28] sm:$0xff]
          %v2794 = vld [vmem:[#allocation2 + $0x38] sm:$0xff]
          %v2795 = vld [vmem:[#allocation2 + $0x48] sm:$0xff]
          %v2796 = vld [vmem:[#allocation2 + $0x58] sm:$0xff]
          %v2797 = vld [vmem:[#allocation2 + $0x68] sm:$0xff]
          %v2798 = vld [vmem:[#allocation2 + $0x78] sm:$0xff]
          %v2799 = vld [vmem:[%s6] sm:$0xff]
          %v2800 = vld [vmem:[%s6 + $0x8] sm:$0xff]
          %v2801 = vld [vmem:[%s6 + $0x10] sm:$0xff]
          %v2802 = vld [vmem:[%s6 + $0x18] sm:$0xff]
          %v2803 = vld [vmem:[%s6 + $0x20] sm:$0xff]
          %v2804 = vld [vmem:[%s6 + $0x28] sm:$0xff]
          %v2805 = vld [vmem:[%s6 + $0x30] sm:$0xff]
          %v2806 = vld [vmem:[%s6 + $0x38] sm:$0xff]
          %v2807 = vadd.f32 %v2791, 1e-06
          %v2808 = vadd.f32 %v2792, 1e-06
          %v2809 = vadd.f32 %v2793, 1e-06
          %v2810 = vadd.f32 %v2794, 1e-06
          %v2811 = vadd.f32 %v2795, 1e-06
          %v2812 = vadd.f32 %v2796, 1e-06
          %v2813 = vadd.f32 %v2797, 1e-06
          %v2814 = vadd.f32 %v2798, 1e-06
          %v2815 = vrcp.pop %v2807
          %v2816 = vrcp.pop %v2808
          %v2817 = vrcp.pop %v2809
          %v2818 = vrcp.pop %v2810
          %v2819 = vrcp.pop %v2811
          %v2820 = vrcp.pop %v2812
          %v2821 = vrcp.pop %v2813
          %v2822 = vrcp.pop %v2814
          %v2823 = vmul.f32 %v2783, %v2815
          %v2824 = vmul.f32 %v2784, %v2816
          %v2825 = vmul.f32 %v2785, %v2817
          %v2826 = vmul.f32 %v2786, %v2818
          %v2827 = vmul.f32 %v2787, %v2819
          %v2828 = vmul.f32 %v2788, %v2820
          %v2829 = vmul.f32 %v2789, %v2821
          %v2830 = vmul.f32 %v2790, %v2822
          %v2831 = vadd.f32 %v2799, %v2823
          %v2832 = vadd.f32 %v2800, %v2824
          %v2833 = vadd.f32 %v2801, %v2825
          %v2834 = vadd.f32 %v2802, %v2826
          %v2835 = vadd.f32 %v2803, %v2827
          %v2836 = vadd.f32 %v2804, %v2828
          %v2837 = vadd.f32 %v2805, %v2829
          %v2838 = vadd.f32 %v2806, %v2830
          %v2839 = vld [vmem:[%s7] sm:$0xff]
          %v2840 = vld [vmem:[%s7 + $0x8] sm:$0xff]
          %v2841 = vld [vmem:[%s7 + $0x10] sm:$0xff]
          %v2842 = vld [vmem:[%s7 + $0x18] sm:$0xff]
          %v2843 = vld [vmem:[%s7 + $0x20] sm:$0xff]
          %v2844 = vld [vmem:[%s7 + $0x28] sm:$0xff]
          %v2845 = vld [vmem:[%s7 + $0x30] sm:$0xff]
          %v2846 = vld [vmem:[%s7 + $0x38] sm:$0xff]
          %2848 = vset.pattern.permute.xlu0 0
          %2849 = vperm.xlu0 %2848, %v2839
          %v2850 = vpop.permute.xlu0 %2849
          %2853 = vset.pattern.permute.xlu0 0
          %2854 = vperm.xlu0 %2853, %v2840
          %v2855 = vpop.permute.xlu0 %2854
          %2858 = vset.pattern.permute.xlu0 0
          %2859 = vperm.xlu0 %2858, %v2841
          %v2860 = vpop.permute.xlu0 %2859
          %2863 = vset.pattern.permute.xlu0 0
          %2864 = vperm.xlu0 %2863, %v2842
          %v2865 = vpop.permute.xlu0 %2864
          %2868 = vset.pattern.permute.xlu0 0
          %2869 = vperm.xlu0 %2868, %v2843
          %v2870 = vpop.permute.xlu0 %2869
          %2873 = vset.pattern.permute.xlu0 0
          %2874 = vperm.xlu0 %2873, %v2844
          %v2875 = vpop.permute.xlu0 %2874
          %2878 = vset.pattern.permute.xlu0 0
          %2879 = vperm.xlu0 %2878, %v2845
          %v2880 = vpop.permute.xlu0 %2879
          %2883 = vset.pattern.permute.xlu0 0
          %2884 = vperm.xlu0 %2883, %v2846
          %v2885 = vpop.permute.xlu0 %2884
          %v2887 = vmul.f32 %v2831, %v2850
          %v2888 = vmul.f32 %v2832, %v2855
          %v2889 = vmul.f32 %v2833, %v2860
          %v2890 = vmul.f32 %v2834, %v2865
          %v2891 = vmul.f32 %v2835, %v2870
          %v2892 = vmul.f32 %v2836, %v2875
          %v2893 = vmul.f32 %v2837, %v2880
          %v2894 = vmul.f32 %v2838, %v2885
          %v2895 = vld [vmem:[%s8] sm:$0x1]
          %v2896 = vld [vmem:[%s9] sm:$0x1]
          %2897 = vadd.xlane.f32.xlu0 %v2887
          %v2898 = vpop.xlane.xlu0 %2897
          %2899 = vadd.xlane.f32.xlu0 %v2888
          %v2900 = vpop.xlane.xlu0 %2899
          %2901 = vadd.xlane.f32.xlu0 %v2889
          %v2902 = vpop.xlane.xlu0 %2901
          %2903 = vadd.xlane.f32.xlu0 %v2890
          %v2904 = vpop.xlane.xlu0 %2903
          %2905 = vadd.xlane.f32.xlu0 %v2891
          %v2906 = vpop.xlane.xlu0 %2905
          %2907 = vadd.xlane.f32.xlu0 %v2892
          %v2908 = vpop.xlane.xlu0 %2907
          %2909 = vadd.xlane.f32.xlu0 %v2893
          %v2910 = vpop.xlane.xlu0 %2909
          %2911 = vadd.xlane.f32.xlu0 %v2894
          %v2912 = vpop.xlane.xlu0 %2911
          %v2913 = vmul.f32 %v2898, %v2222
          %v2914 = vmul.f32 %v2900, %v2222
          %v2915 = vmul.f32 %v2902, %v2222
          %v2916 = vmul.f32 %v2904, %v2222
          %v2917 = vmul.f32 %v2906, %v2222
          %v2918 = vmul.f32 %v2908, %v2222
          %v2919 = vmul.f32 %v2910, %v2222
          %v2920 = vmul.f32 %v2912, %v2222
          %v2921 = vsub.f32 %v2887, %v2913
          %v2922 = vsub.f32 %v2888, %v2914
          %v2923 = vsub.f32 %v2889, %v2915
          %v2924 = vsub.f32 %v2890, %v2916
          %v2925 = vsub.f32 %v2891, %v2917
          %v2926 = vsub.f32 %v2892, %v2918
          %v2927 = vsub.f32 %v2893, %v2919
          %v2928 = vsub.f32 %v2894, %v2920
          %v2929 = vmul.f32 %v2921, %v2921
          %v2930 = vmul.f32 %v2922, %v2922
          %v2931 = vmul.f32 %v2923, %v2923
          %v2932 = vmul.f32 %v2924, %v2924
          %v2933 = vmul.f32 %v2925, %v2925
          %v2934 = vmul.f32 %v2926, %v2926
          %v2935 = vmul.f32 %v2927, %v2927
          %v2936 = vmul.f32 %v2928, %v2928
          %2937 = vadd.xlane.f32.xlu0 %v2929
          %v2938 = vpop.xlane.xlu0 %2937
          %2939 = vadd.xlane.f32.xlu0 %v2930
          %v2940 = vpop.xlane.xlu0 %2939
          %2941 = vadd.xlane.f32.xlu0 %v2931
          %v2942 = vpop.xlane.xlu0 %2941
          %2943 = vadd.xlane.f32.xlu0 %v2932
          %v2944 = vpop.xlane.xlu0 %2943
          %2945 = vadd.xlane.f32.xlu0 %v2933
          %v2946 = vpop.xlane.xlu0 %2945
          %2947 = vadd.xlane.f32.xlu0 %v2934
          %v2948 = vpop.xlane.xlu0 %2947
          %2949 = vadd.xlane.f32.xlu0 %v2935
          %v2950 = vpop.xlane.xlu0 %2949
          %2951 = vadd.xlane.f32.xlu0 %v2936
          %v2952 = vpop.xlane.xlu0 %2951
          %v2953 = vmul.f32 %v2938, %v2222
          %v2954 = vmul.f32 %v2940, %v2222
          %v2955 = vmul.f32 %v2942, %v2222
          %v2956 = vmul.f32 %v2944, %v2222
          %v2957 = vmul.f32 %v2946, %v2222
          %v2958 = vmul.f32 %v2948, %v2222
          %v2959 = vmul.f32 %v2950, %v2222
          %v2960 = vmul.f32 %v2952, %v2222
          %v2961 = vadd.f32 %v2953, 1e-05
          %v2962 = vadd.f32 %v2954, 1e-05
          %v2963 = vadd.f32 %v2955, 1e-05
          %v2964 = vadd.f32 %v2956, 1e-05
          %v2965 = vadd.f32 %v2957, 1e-05
          %v2966 = vadd.f32 %v2958, 1e-05
          %v2967 = vadd.f32 %v2959, 1e-05
          %v2968 = vadd.f32 %v2960, 1e-05
          %v2969 = vrsqrt.pop %v2961
          %v2970 = vrsqrt.pop %v2962
          %v2971 = vrsqrt.pop %v2963
          %v2972 = vrsqrt.pop %v2964
          %v2973 = vrsqrt.pop %v2965
          %v2974 = vrsqrt.pop %v2966
          %v2975 = vrsqrt.pop %v2967
          %v2976 = vrsqrt.pop %v2968
          %v2977 = vmul.f32 %v2921, %v2969
          %v2978 = vmul.f32 %v2922, %v2970
          %v2979 = vmul.f32 %v2923, %v2971
          %v2980 = vmul.f32 %v2924, %v2972
          %v2981 = vmul.f32 %v2925, %v2973
          %v2982 = vmul.f32 %v2926, %v2974
          %v2983 = vmul.f32 %v2927, %v2975
          %v2984 = vmul.f32 %v2928, %v2976
          %v2986 = vlaneseq
          %v2987 = vshrl.u32 %v2986, 7
          %v2988 = vsub.s32 0, %v2987
          %v2989 = vrot.slane %v2895, %v2988
          %v2991 = vmul.f32 %v2977, %v2989
          %v2992 = vmul.f32 %v2978, %v2989
          %v2993 = vmul.f32 %v2979, %v2989
          %v2994 = vmul.f32 %v2980, %v2989
          %v2995 = vmul.f32 %v2981, %v2989
          %v2996 = vmul.f32 %v2982, %v2989
          %v2997 = vmul.f32 %v2983, %v2989
          %v2998 = vmul.f32 %v2984, %v2989
          %v3000 = vlaneseq
          %v3001 = vshrl.u32 %v3000, 7
          %v3002 = vsub.s32 0, %v3001
          %v3003 = vrot.slane %v2896, %v3002
          %v3005 = vadd.f32 %v2991, %v3003
          %v3006 = vadd.f32 %v2992, %v3003
          %v3007 = vadd.f32 %v2993, %v3003
          %v3008 = vadd.f32 %v2994, %v3003
          %v3009 = vadd.f32 %v2995, %v3003
          %v3010 = vadd.f32 %v2996, %v3003
          %v3011 = vadd.f32 %v2997, %v3003
          %v3012 = vadd.f32 %v2998, %v3003
          %v3013 = vmax.f32 %v3005, 0.0
          %v3014 = vmax.f32 %v3006, 0.0
          %v3015 = vmax.f32 %v3007, 0.0
          %v3016 = vmax.f32 %v3008, 0.0
          %v3017 = vmax.f32 %v3009, 0.0
          %v3018 = vmax.f32 %v3010, 0.0
          %v3019 = vmax.f32 %v3011, 0.0
          %v3020 = vmax.f32 %v3012, 0.0
          %3021 = vst [vmem:[#allocation3] sm:$0xff] %v3013
          %3022 = vst [vmem:[#allocation3 + $0x8] sm:$0xff] %v3014
          %3023 = vst [vmem:[#allocation3 + $0x10] sm:$0xff] %v3015
          %3024 = vst [vmem:[#allocation3 + $0x18] sm:$0xff] %v3016
          %3025 = vst [vmem:[#allocation3 + $0x20] sm:$0xff] %v3017
          %3026 = vst [vmem:[#allocation3 + $0x28] sm:$0xff] %v3018
          %3027 = vst [vmem:[#allocation3 + $0x30] sm:$0xff] %v3019
          %3028 = vst [vmem:[#allocation3 + $0x38] sm:$0xff] %v3020
        $region76: #{gated_gcn_forward.1} parent=67 // pred_fallthru
          _
        %s3029 = sand.u32 %s330, 1
        %s3030 = scalar_lea.sflag [#allocation6], %s3029
        %s3031 = sand.u32 %s330, 1
        %s3032 = smul.addr %s3031, 128
        %s3033 = scalar_lea.vmem [#allocation5], %s3032
        // Predicated region
        $region77: #{gated_gcn_forward.1} parent=67 // pred_check
          %p3034 = pneg %p314
        $region78: #{gated_gcn_forward.1} parent=67 // pred_check_branch
          %3036 = sbr.rel (%p3034) target = $region80
        $region79: #{gated_gcn_forward.1} parent=67 // pred_region
          %s3038 = ssub.s32 1024, 1024
          %3039 = vsyncadd [#allocation4], %s3038
          %s3040 = sshll.u32 [#allocation3], 4
          %s3041 = int_to_ptr.vmem [resolvable:$true] %s3040
          %3046 = dma.vmem_to_hbm [thread:$0]  %s3041, 1024, %s12, [#allocation4], 128, 128, 8
        $region80: #{gated_gcn_forward.1} parent=67 // pred_fallthru
          _
        // Predicated region
        $region81: #{gated_gcn_forward.1} parent=67 // pred_check
          %p3047 = pneg %p340
        $region82: #{gated_gcn_forward.1} parent=67 // pred_check_branch
          %3049 = sbr.rel (%p3047) target = $region84
        $region83: #{gated_gcn_forward.1} parent=67 // pred_region
          %s3050 = smul.u32 32, %s29
          %s3052 = ssub.s32 2048, 2048
          %3053 = vsyncadd %s3030, %s3052
          %s3054 = smul.addr %s3050, 64
          %s3055 = scalar_lea.hbm %s13, %s3054
          %s3056 = sshll.u32 %s3033, 4
          %s3057 = int_to_ptr.vmem [resolvable:$true] %s3056
          %3062 = dma.vmem_to_hbm [thread:$0]  %s3057, 2048, %s3055, %s3030, 64, 64, 4
        $region84: #{gated_gcn_forward.1} parent=67 // pred_fallthru
          _
        // Predicated region
        $region85: #{gated_gcn_forward.1} parent=67 // pred_check
          %p3063 = pneg %p314
        $region86: #{gated_gcn_forward.1} parent=67 // pred_check_branch
          %3065 = sbr.rel (%p3063) target = $region88
        $region87: #{gated_gcn_forward.1} parent=67 // pred_region
          %3066 = dma.done [#allocation4], 1024
        $region88: #{gated_gcn_forward.1} parent=67 // pred_fallthru
          _
      $region68: #{gated_gcn_forward.1} parent=5 // pred_fallthru
        _
      %p3067 = scmp.le.s32.totalorder 2, %s24
      // Predicated region
      $region89: #{gated_gcn_forward.1} parent=5 // pred_check
        %p3068 = pneg %p3067
      $region90: #{gated_gcn_forward.1} parent=5 // pred_check_branch
        %3070 = sbr.rel (%p3068) target = $region92
      $region91: #{gated_gcn_forward.1} parent=5 // pred_region
        %s3071 = ssub.s32 %s24, 2
        // Predicated region
        $region93: #{gated_gcn_forward.1} parent=91 // pred_check
          %p3072 = pneg %p346
        $region94: #{gated_gcn_forward.1} parent=91 // pred_check_branch
          %3074 = sbr.rel (%p3072) target = $region96
        $region95: #{gated_gcn_forward.1} parent=91 // pred_region
          %s3075 = sand.u32 %s331, 1
          %s3076 = scalar_lea.sflag [#allocation6], %s3075
          %s3077 = sand.u32 %s331, 1
          %s3078 = smul.addr %s3077, 128
          %s3079 = scalar_lea.vmem [#allocation5], %s3078
          %3080 = dma.done %s3076, 2048
        $region96: #{gated_gcn_forward.1} parent=91 // pred_fallthru
          _
      $region92: #{gated_gcn_forward.1} parent=5 // pred_fallthru
        _
    $region6: #{gated_gcn_forward.1} parent=1 // loop_footer
      %s28 = sadd.s32 1, %s24
    $region7: #{gated_gcn_forward.1} parent=1 // loop_footer_branch
      %23 = sbr.rel target = $region3
    $region8: #{gated_gcn_forward.1} parent=1 // loop_exit
      _
    %3081 = vsyncpa [#allocation4], 1
    %s3082 = scalar_lea.sflag [#allocation4], 1
    %3083 = vsyncpa %s3082, 1
    %3084 = vsyncpa [#allocation6], 1
    %s3085 = scalar_lea.sflag [#allocation6], 1
    %3086 = vsyncpa %s3085, 1

</llo_original>
